<compile_context>
chip_gen: v5e
topology: v5e:2x2
jax: 0.10.0
libtpu: 0.0.40
codegen_flags: <defaults>
</compile_context>

<pallas_src>
import functools

import numpy as np
import jax
import jax.numpy as jnp
from jax import lax
from jax.experimental import pallas as pl
from jax.experimental.pallas import tpu as pltpu

BN_EPS = 1e-5


# ----------------------------- Pallas kernel ------------------------------- #

def _conv3x3_taps(x, w_ref, b_ref, mask_ref, *, W, L):
    """SAME 3x3 conv (BN folded) + ReLU on a lane-packed (Cin, L) slab.

    x: (Cin, L) VMEM value; w_ref: (9, Cout, Cin) per-tap weights; b_ref: (Cout, 1);
    mask_ref: (9, L) tap validity masks (handles image borders AND the seams between
    batch elements packed along the lane dim).  Returns (Cout, L) f32.
    """
    # Center tap first: no roll, no mask.
    acc = jnp.dot(w_ref[4], x, preferred_element_type=jnp.float32)
    for k in range(9):
        if k == 4:
            continue
        oy, ox = k // 3 - 1, k % 3 - 1
        shift = (-(oy * W + ox)) % L
        src = pltpu.roll(x, shift=shift, axis=1) * mask_ref[k:k + 1, :]
        acc = acc + jnp.dot(w_ref[k], src, preferred_element_type=jnp.float32)
    return jnp.maximum(acc + b_ref[...], 0.0)


def _fused_kernel(x_ref, mask_ref, w1_ref, b1_ref, w2_ref, b2_ref,
                  wh_ref, add_ref, o_ref, *, W, L):
    """One batch group: conv1+bn1+relu -> conv2+bn2+relu -> folded linear head."""
    y1 = _conv3x3_taps(x_ref[0], w1_ref, b1_ref, mask_ref, W=W, L=L)   # (E, L)
    y2 = _conv3x3_taps(y1, w2_ref, b2_ref, mask_ref, W=W, L=L)         # (E, L)
    # Folded head: fuse_fc/pre_fc1/pre_fc2/pre_fc3 collapsed into one (3, E) matmul;
    # pos_embedding, the action path and all biases live in add_ref (per element).
    o_ref[0] = (jnp.dot(wh_ref[...], y2, preferred_element_type=jnp.float32)
                + add_ref[0])                                          # (3, L)


# ------------------------------ JAX wrapper --------------------------------- #

def embedding_forward_pallas(state, action, P, *, batch_per_step=None):
    """state: (B, C, H, W) NCHW, action: (B,).  Returns (B, C, H, W) with C == 3."""
    B, C, H, W = state.shape
    assert C == 3, "final reshape (B, 3, H*W) -> (B, C, H, W) requires C == 3"
    E = P['w_conv1'].shape[0]
    HW = H * W
    f32 = jnp.float32

    # Pack batch elements along the lane dim (up to ~512 lanes per grid step) so a
    # single step keeps the VPU/MXU lane-dense and per-step overhead amortized.
    if batch_per_step is None:
        batch_per_step = max(1, min(B, 512 // HW)) if HW <= 512 else 1
    BG = batch_per_step
    G = -(-B // BG)            # number of grid steps
    Bp = G * BG
    L = BG * HW                # lane width per step

    state = state.astype(f32)
    action = action.astype(f32)
    if Bp != B:
        state = jnp.pad(state, ((0, Bp - B), (0, 0), (0, 0), (0, 0)))
        action = jnp.pad(action, ((0, Bp - B),))

    Cp = -(-C // 8) * 8        # pad input channels to a sublane multiple (3 -> 8)

    # ---- fold eval-mode BatchNorm (running mean 0, var 1) into the convs ----
    s1 = P['bn1_g'] / jnp.sqrt(1.0 + BN_EPS)
    s2 = P['bn2_g'] / jnp.sqrt(1.0 + BN_EPS)
    # per-tap weights, tap order k = 3*kh + kw (same ordering as the in-kernel rolls)
    w1_9 = P['w_conv1'].transpose(2, 3, 0, 1).reshape(9, E, C) * s1[None, :, None]
    w1_9 = jnp.pad(w1_9, ((0, 0), (0, 0), (0, Cp - C)))                 # (9, E, Cp)
    b1t = (P['b_conv1'] * s1 + P['bn1_b']).reshape(E, 1)
    w2_9 = P['w_conv2'].transpose(2, 3, 0, 1).reshape(9, E, E) * s2[None, :, None]
    b2t = (P['b_conv2'] * s2 + P['bn2_b']).reshape(E, 1)

    # ---- fold the all-linear head into one (E,3) map + additive terms ----
    wf_t = P['w_fuse'].T                       # (2E, E)
    wfx, wfa = wf_t[:E], wf_t[E:]
    m3 = P['w_pre3'].T                         # (E, 3)
    m2 = P['w_pre2'].T @ m3                    # (2E, 3)
    m1 = P['w_pre1'].T @ m2                    # (E, 3)
    w_head = wfx @ m1                          # (E, 3)   multiplies the conv features
    w_head_a = wfa @ m1                        # (E, 3)   multiplies the action embedding
    bias_head = (P['b_fuse'] @ m1 + P['b_pre1'] @ m2
                 + P['b_pre2'] @ m3 + P['b_pre3'])          # (3,)
    wh_t = w_head.T                            # (3, E)

    # action path + pos_embedding + biases -> one per-batch additive (3, HW) term
    a_emb = action[:, None] * P['w_act'][:, 0][None, :] + P['b_act'][None, :]   # (Bp, E)
    a_head = a_emb @ w_head_a + bias_head[None, :]                              # (Bp, 3)
    pos_head = P['pos'] @ w_head                                                # (HW, 3)
    add_t = (pos_head[None] + a_head[:, None, :]).transpose(0, 2, 1)            # (Bp, 3, HW)
    add_packed = (add_t.reshape(G, BG, 3, HW).transpose(0, 2, 1, 3)
                  .reshape(G, 3, L))

    # ---- raw input packed along lanes: (Bp, C, HW) -> (G, Cp, L) ----
    x = state.reshape(Bp, C, HW)
    x = jnp.pad(x, ((0, 0), (0, Cp - C), (0, 0)))
    x_packed = x.reshape(G, BG, Cp, HW).transpose(0, 2, 1, 3).reshape(G, Cp, L)

    # ---- validity masks for the 9 conv taps (compile-time numpy constants) ----
    hh, ww = np.meshgrid(np.arange(H), np.arange(W), indexing='ij')
    mrows = []
    for k in range(9):
        oy, ox = k // 3 - 1, k % 3 - 1
        m = ((hh + oy >= 0) & (hh + oy < H) & (ww + ox >= 0) & (ww + ox < W))
        mrows.append(np.tile(m.reshape(-1).astype(np.float32), BG))
    mask9 = jnp.asarray(np.stack(mrows))                                        # (9, L)

    kernel = functools.partial(_fused_kernel, W=W, L=L)

    out = pl.pallas_call(
        kernel,
        out_shape=jax.ShapeDtypeStruct((G, 3, L), f32),
        grid=(G,),
        in_specs=[
            pl.BlockSpec((1, Cp, L), lambda g: (g, 0, 0)),      # raw input (per group)
            pl.BlockSpec((9, L), lambda g: (0, 0)),             # tap masks (resident)
            pl.BlockSpec((9, E, Cp), lambda g: (0, 0, 0)),      # w1 per-tap (bn1 folded)
            pl.BlockSpec((E, 1), lambda g: (0, 0)),             # b1 (bn1 folded)
            pl.BlockSpec((9, E, E), lambda g: (0, 0, 0)),       # w2 per-tap (bn2 folded)
            pl.BlockSpec((E, 1), lambda g: (0, 0)),             # b2 (bn2 folded)
            pl.BlockSpec((3, E), lambda g: (0, 0)),             # folded head weight
            pl.BlockSpec((1, 3, L), lambda g: (g, 0, 0)),       # pos/action/bias term
        ],
        out_specs=pl.BlockSpec((1, 3, L), lambda g: (g, 0, 0)),
        compiler_params=pltpu.CompilerParams(
            dimension_semantics=("parallel",)),
    )(x_packed, mask9, w1_9, b1t, w2_9, b2t, wh_t, add_packed)

    # (G, 3, L) -> (B, 3, HW) -> (B, C, H, W): matches PyTorch transpose(1,2).reshape(...)
    out = (out.reshape(G, 3, BG, HW).transpose(0, 2, 1, 3)
           .reshape(Bp, 3, HW)[:B].reshape(B, C, H, W))
    return out


# ---------------------------- pure-JAX reference ---------------------------- #

def reference_forward(state, action, P):
    B, C, H, W = state.shape
    E = P['w_conv1'].shape[0]

    def bn(x, g, b):  # eval-mode BN, running stats (0, 1)
        s = g / jnp.sqrt(1.0 + BN_EPS)
        return x * s[None, :, None, None] + b[None, :, None, None]

    dn = ('NCHW', 'OIHW', 'NCHW')
    y = lax.conv_general_dilated(state, P['w_conv1'], (1, 1), 'SAME',
                                 dimension_numbers=dn)
    y = jnp.maximum(bn(y + P['b_conv1'][None, :, None, None], P['bn1_g'], P['bn1_b']), 0.0)
    y = lax.conv_general_dilated(y, P['w_conv2'], (1, 1), 'SAME',
                                 dimension_numbers=dn)
    y = jnp.maximum(bn(y + P['b_conv2'][None, :, None, None], P['bn2_g'], P['bn2_b']), 0.0)

    x = y.reshape(B, E, H * W).transpose(0, 2, 1) + P['pos'][None]
    a_emb = action[:, None] @ P['w_act'].T + P['b_act'][None]          # (B, E)
    a_emb = jnp.broadcast_to(a_emb[:, None, :], (B, H * W, E))
    fused = jnp.concatenate([x, a_emb], axis=-1)
    x = fused @ P['w_fuse'].T + P['b_fuse']
    x = x @ P['w_pre1'].T + P['b_pre1']
    x = x @ P['w_pre2'].T + P['b_pre2']
    x = x @ P['w_pre3'].T + P['b_pre3']
    return x.transpose(0, 2, 1).reshape(B, C, H, W)


# ----------------------------------- main ----------------------------------- #

if __name__ == "__main__":
    # data_type='continuous', grid_shape=(3, 8, 8), mask_size=8, embed_dim=32
    B, C, H, W = 2, 3, 8, 8
    E = 32

    key = jax.random.PRNGKey(0)
    ks = jax.random.split(key, 24)

    def init(k, shape, scale=0.1):
        return scale * jax.random.normal(k, shape, jnp.float32)

    P = {
        'w_conv1': init(ks[0], (E, C, 3, 3)),
        'b_conv1': init(ks[1], (E,)),
        'bn1_g':   1.0 + init(ks[2], (E,)),
        'bn1_b':   init(ks[3], (E,)),
        'w_conv2': init(ks[4], (E, E, 3, 3)),
        'b_conv2': init(ks[5], (E,)),
        'bn2_g':   1.0 + init(ks[6], (E,)),
        'bn2_b':   init(ks[7], (E,)),
        'pos':     jax.random.normal(ks[8], (H * W, E), jnp.float32),
        'w_act':   init(ks[9], (E, 1)),
        'b_act':   init(ks[10], (E,)),
        'w_fuse':  init(ks[11], (E, 2 * E)),
        'b_fuse':  init(ks[12], (E,)),
        'w_pre1':  init(ks[13], (2 * E, E)),
        'b_pre1':  init(ks[14], (2 * E,)),
        'w_pre2':  init(ks[15], (E, 2 * E)),
        'b_pre2':  init(ks[16], (E,)),
        'w_pre3':  init(ks[17], (3, E)),
        'b_pre3':  init(ks[18], (3,)),
    }

    state = jax.random.normal(ks[19], (B, C, H, W), jnp.float32)
    action = jax.random.normal(ks[20], (B,), jnp.float32)

    fwd = jax.jit(embedding_forward_pallas)
    out = fwd(state, action, P)
    out = jax.block_until_ready(out)

    ref = reference_forward(state, action, P)
    assert out.shape == (B, C, H, W)
    err = float(jnp.max(jnp.abs(out - ref)))
    assert jnp.allclose(out, ref, atol=1e-4, rtol=1e-4), f"max abs err {err}"

    print("KERNEL_OK")
</pallas_src>

<mosaic_0001>
module attributes {stable_mosaic.version = 11 : i64} {
  func.func @_fused_kernel(%arg0: i32, %arg1: memref<1x8x128xf32, #tpu.memory_space<vmem>>, %arg2: memref<9x128xf32, #tpu.memory_space<vmem>>, %arg3: memref<9x32x8xf32, #tpu.memory_space<vmem>>, %arg4: memref<32x1xf32, #tpu.memory_space<vmem>>, %arg5: memref<9x32x32xf32, #tpu.memory_space<vmem>>, %arg6: memref<32x1xf32, #tpu.memory_space<vmem>>, %arg7: memref<3x32xf32, #tpu.memory_space<vmem>>, %arg8: memref<1x3x128xf32, #tpu.memory_space<vmem>>, %arg9: memref<1x3x128xf32, #tpu.memory_space<vmem>>) attributes {dimension_semantics = [#tpu.dimension_semantics<parallel>], iteration_bounds = array<i64: 1>, scalar_prefetch = 0 : i64, scratch_operands = 0 : i64, tpu.core_type = #tpu.core_type<tc>, window_params = [{transform_indices = @transform_0, window_bounds = array<i64: 1, 8, 128>}, {pipeline_mode = #tpu.pipeline_mode<synchronous>, transform_indices = @transform_1, window_bounds = array<i64: 9, 128>}, {pipeline_mode = #tpu.pipeline_mode<synchronous>, transform_indices = @transform_2, window_bounds = array<i64: 9, 32, 8>}, {pipeline_mode = #tpu.pipeline_mode<synchronous>, transform_indices = @transform_3, window_bounds = array<i64: 32, 1>}, {pipeline_mode = #tpu.pipeline_mode<synchronous>, transform_indices = @transform_4, window_bounds = array<i64: 9, 32, 32>}, {pipeline_mode = #tpu.pipeline_mode<synchronous>, transform_indices = @transform_5, window_bounds = array<i64: 32, 1>}, {pipeline_mode = #tpu.pipeline_mode<synchronous>, transform_indices = @transform_6, window_bounds = array<i64: 3, 32>}, {transform_indices = @transform_7, window_bounds = array<i64: 1, 3, 128>}, {transform_indices = @transform_8, window_bounds = array<i64: 1, 3, 128>}]} {
    %c0 = arith.constant 0 : index
    %c0_0 = arith.constant 0 : index
    %c0_1 = arith.constant 0 : index
    %0 = vector.load %arg1[%c0, %c0_0, %c0_1] : memref<1x8x128xf32, #tpu.memory_space<vmem>>, vector<1x8x128xf32>
    %1 = vector.shape_cast %0 : vector<1x8x128xf32> to vector<8x128xf32>
    %c4 = arith.constant 4 : index
    %c0_2 = arith.constant 0 : index
    %c0_3 = arith.constant 0 : index
    %2 = vector.load %arg3[%c4, %c0_2, %c0_3] : memref<9x32x8xf32, #tpu.memory_space<vmem>>, vector<1x32x8xf32>
    %3 = vector.shape_cast %2 : vector<1x32x8xf32> to vector<32x8xf32>
    %cst = arith.constant dense<0.000000e+00> : vector<32x128xf32>
    %4 = tpu.matmul %3, %1, %cst {dimension_numbers = #tpu.dot_dimension_numbers<[1], [0], [0], [1], [0, 0, 1, 1], [], []>} : vector<32x8xf32>, vector<8x128xf32>, vector<32x128xf32> -> vector<32x128xf32>
    %c9_i32 = arith.constant 9 : i32
    %5 = tpu.dynamic_rotate %1 by %c9_i32 dim 1 : vector<8x128xf32>, i32 -> vector<8x128xf32>
    %c0_4 = arith.constant 0 : index
    %c0_5 = arith.constant 0 : index
    %6 = vector.load %arg2[%c0_4, %c0_5] : memref<9x128xf32, #tpu.memory_space<vmem>>, vector<1x128xf32>
    %7 = vector.broadcast %6 : vector<1x128xf32> to vector<8x128xf32>
    %8 = arith.mulf %5, %7 : vector<8x128xf32>
    %c0_6 = arith.constant 0 : index
    %c0_7 = arith.constant 0 : index
    %c0_8 = arith.constant 0 : index
    %9 = vector.load %arg3[%c0_6, %c0_7, %c0_8] : memref<9x32x8xf32, #tpu.memory_space<vmem>>, vector<1x32x8xf32>
    %10 = vector.shape_cast %9 : vector<1x32x8xf32> to vector<32x8xf32>
    %cst_9 = arith.constant dense<0.000000e+00> : vector<32x128xf32>
    %11 = tpu.matmul %10, %8, %cst_9 {dimension_numbers = #tpu.dot_dimension_numbers<[1], [0], [0], [1], [0, 0, 1, 1], [], []>} : vector<32x8xf32>, vector<8x128xf32>, vector<32x128xf32> -> vector<32x128xf32>
    %12 = arith.addf %4, %11 : vector<32x128xf32>
    %c8_i32 = arith.constant 8 : i32
    %13 = tpu.dynamic_rotate %1 by %c8_i32 dim 1 : vector<8x128xf32>, i32 -> vector<8x128xf32>
    %c1 = arith.constant 1 : index
    %c0_10 = arith.constant 0 : index
    %14 = vector.load %arg2[%c1, %c0_10] : memref<9x128xf32, #tpu.memory_space<vmem>>, vector<1x128xf32>
    %15 = vector.broadcast %14 : vector<1x128xf32> to vector<8x128xf32>
    %16 = arith.mulf %13, %15 : vector<8x128xf32>
    %c1_11 = arith.constant 1 : index
    %c0_12 = arith.constant 0 : index
    %c0_13 = arith.constant 0 : index
    %17 = vector.load %arg3[%c1_11, %c0_12, %c0_13] : memref<9x32x8xf32, #tpu.memory_space<vmem>>, vector<1x32x8xf32>
    %18 = vector.shape_cast %17 : vector<1x32x8xf32> to vector<32x8xf32>
    %cst_14 = arith.constant dense<0.000000e+00> : vector<32x128xf32>
    %19 = tpu.matmul %18, %16, %cst_14 {dimension_numbers = #tpu.dot_dimension_numbers<[1], [0], [0], [1], [0, 0, 1, 1], [], []>} : vector<32x8xf32>, vector<8x128xf32>, vector<32x128xf32> -> vector<32x128xf32>
    %20 = arith.addf %12, %19 : vector<32x128xf32>
    %c7_i32 = arith.constant 7 : i32
    %21 = tpu.dynamic_rotate %1 by %c7_i32 dim 1 : vector<8x128xf32>, i32 -> vector<8x128xf32>
    %c2 = arith.constant 2 : index
    %c0_15 = arith.constant 0 : index
    %22 = vector.load %arg2[%c2, %c0_15] : memref<9x128xf32, #tpu.memory_space<vmem>>, vector<1x128xf32>
    %23 = vector.broadcast %22 : vector<1x128xf32> to vector<8x128xf32>
    %24 = arith.mulf %21, %23 : vector<8x128xf32>
    %c2_16 = arith.constant 2 : index
    %c0_17 = arith.constant 0 : index
    %c0_18 = arith.constant 0 : index
    %25 = vector.load %arg3[%c2_16, %c0_17, %c0_18] : memref<9x32x8xf32, #tpu.memory_space<vmem>>, vector<1x32x8xf32>
    %26 = vector.shape_cast %25 : vector<1x32x8xf32> to vector<32x8xf32>
    %cst_19 = arith.constant dense<0.000000e+00> : vector<32x128xf32>
    %27 = tpu.matmul %26, %24, %cst_19 {dimension_numbers = #tpu.dot_dimension_numbers<[1], [0], [0], [1], [0, 0, 1, 1], [], []>} : vector<32x8xf32>, vector<8x128xf32>, vector<32x128xf32> -> vector<32x128xf32>
    %28 = arith.addf %20, %27 : vector<32x128xf32>
    %c1_i32 = arith.constant 1 : i32
    %29 = tpu.dynamic_rotate %1 by %c1_i32 dim 1 : vector<8x128xf32>, i32 -> vector<8x128xf32>
    %c3 = arith.constant 3 : index
    %c0_20 = arith.constant 0 : index
    %30 = vector.load %arg2[%c3, %c0_20] : memref<9x128xf32, #tpu.memory_space<vmem>>, vector<1x128xf32>
    %31 = vector.broadcast %30 : vector<1x128xf32> to vector<8x128xf32>
    %32 = arith.mulf %29, %31 : vector<8x128xf32>
    %c3_21 = arith.constant 3 : index
    %c0_22 = arith.constant 0 : index
    %c0_23 = arith.constant 0 : index
    %33 = vector.load %arg3[%c3_21, %c0_22, %c0_23] : memref<9x32x8xf32, #tpu.memory_space<vmem>>, vector<1x32x8xf32>
    %34 = vector.shape_cast %33 : vector<1x32x8xf32> to vector<32x8xf32>
    %cst_24 = arith.constant dense<0.000000e+00> : vector<32x128xf32>
    %35 = tpu.matmul %34, %32, %cst_24 {dimension_numbers = #tpu.dot_dimension_numbers<[1], [0], [0], [1], [0, 0, 1, 1], [], []>} : vector<32x8xf32>, vector<8x128xf32>, vector<32x128xf32> -> vector<32x128xf32>
    %36 = arith.addf %28, %35 : vector<32x128xf32>
    %c127_i32 = arith.constant 127 : i32
    %37 = tpu.dynamic_rotate %1 by %c127_i32 dim 1 : vector<8x128xf32>, i32 -> vector<8x128xf32>
    %c5 = arith.constant 5 : index
    %c0_25 = arith.constant 0 : index
    %38 = vector.load %arg2[%c5, %c0_25] : memref<9x128xf32, #tpu.memory_space<vmem>>, vector<1x128xf32>
    %39 = vector.broadcast %38 : vector<1x128xf32> to vector<8x128xf32>
    %40 = arith.mulf %37, %39 : vector<8x128xf32>
    %c5_26 = arith.constant 5 : index
    %c0_27 = arith.constant 0 : index
    %c0_28 = arith.constant 0 : index
    %41 = vector.load %arg3[%c5_26, %c0_27, %c0_28] : memref<9x32x8xf32, #tpu.memory_space<vmem>>, vector<1x32x8xf32>
    %42 = vector.shape_cast %41 : vector<1x32x8xf32> to vector<32x8xf32>
    %cst_29 = arith.constant dense<0.000000e+00> : vector<32x128xf32>
    %43 = tpu.matmul %42, %40, %cst_29 {dimension_numbers = #tpu.dot_dimension_numbers<[1], [0], [0], [1], [0, 0, 1, 1], [], []>} : vector<32x8xf32>, vector<8x128xf32>, vector<32x128xf32> -> vector<32x128xf32>
    %44 = arith.addf %36, %43 : vector<32x128xf32>
    %c121_i32 = arith.constant 121 : i32
    %45 = tpu.dynamic_rotate %1 by %c121_i32 dim 1 : vector<8x128xf32>, i32 -> vector<8x128xf32>
    %c6 = arith.constant 6 : index
    %c0_30 = arith.constant 0 : index
    %46 = vector.load %arg2[%c6, %c0_30] : memref<9x128xf32, #tpu.memory_space<vmem>>, vector<1x128xf32>
    %47 = vector.broadcast %46 : vector<1x128xf32> to vector<8x128xf32>
    %48 = arith.mulf %45, %47 : vector<8x128xf32>
    %c6_31 = arith.constant 6 : index
    %c0_32 = arith.constant 0 : index
    %c0_33 = arith.constant 0 : index
    %49 = vector.load %arg3[%c6_31, %c0_32, %c0_33] : memref<9x32x8xf32, #tpu.memory_space<vmem>>, vector<1x32x8xf32>
    %50 = vector.shape_cast %49 : vector<1x32x8xf32> to vector<32x8xf32>
    %cst_34 = arith.constant dense<0.000000e+00> : vector<32x128xf32>
    %51 = tpu.matmul %50, %48, %cst_34 {dimension_numbers = #tpu.dot_dimension_numbers<[1], [0], [0], [1], [0, 0, 1, 1], [], []>} : vector<32x8xf32>, vector<8x128xf32>, vector<32x128xf32> -> vector<32x128xf32>
    %52 = arith.addf %44, %51 : vector<32x128xf32>
    %c120_i32 = arith.constant 120 : i32
    %53 = tpu.dynamic_rotate %1 by %c120_i32 dim 1 : vector<8x128xf32>, i32 -> vector<8x128xf32>
    %c7 = arith.constant 7 : index
    %c0_35 = arith.constant 0 : index
    %54 = vector.load %arg2[%c7, %c0_35] : memref<9x128xf32, #tpu.memory_space<vmem>>, vector<1x128xf32>
    %55 = vector.broadcast %54 : vector<1x128xf32> to vector<8x128xf32>
    %56 = arith.mulf %53, %55 : vector<8x128xf32>
    %c7_36 = arith.constant 7 : index
    %c0_37 = arith.constant 0 : index
    %c0_38 = arith.constant 0 : index
    %57 = vector.load %arg3[%c7_36, %c0_37, %c0_38] : memref<9x32x8xf32, #tpu.memory_space<vmem>>, vector<1x32x8xf32>
    %58 = vector.shape_cast %57 : vector<1x32x8xf32> to vector<32x8xf32>
    %cst_39 = arith.constant dense<0.000000e+00> : vector<32x128xf32>
    %59 = tpu.matmul %58, %56, %cst_39 {dimension_numbers = #tpu.dot_dimension_numbers<[1], [0], [0], [1], [0, 0, 1, 1], [], []>} : vector<32x8xf32>, vector<8x128xf32>, vector<32x128xf32> -> vector<32x128xf32>
    %60 = arith.addf %52, %59 : vector<32x128xf32>
    %c119_i32 = arith.constant 119 : i32
    %61 = tpu.dynamic_rotate %1 by %c119_i32 dim 1 : vector<8x128xf32>, i32 -> vector<8x128xf32>
    %c8 = arith.constant 8 : index
    %c0_40 = arith.constant 0 : index
    %62 = vector.load %arg2[%c8, %c0_40] : memref<9x128xf32, #tpu.memory_space<vmem>>, vector<1x128xf32>
    %63 = vector.broadcast %62 : vector<1x128xf32> to vector<8x128xf32>
    %64 = arith.mulf %61, %63 : vector<8x128xf32>
    %c8_41 = arith.constant 8 : index
    %c0_42 = arith.constant 0 : index
    %c0_43 = arith.constant 0 : index
    %65 = vector.load %arg3[%c8_41, %c0_42, %c0_43] : memref<9x32x8xf32, #tpu.memory_space<vmem>>, vector<1x32x8xf32>
    %66 = vector.shape_cast %65 : vector<1x32x8xf32> to vector<32x8xf32>
    %cst_44 = arith.constant dense<0.000000e+00> : vector<32x128xf32>
    %67 = tpu.matmul %66, %64, %cst_44 {dimension_numbers = #tpu.dot_dimension_numbers<[1], [0], [0], [1], [0, 0, 1, 1], [], []>} : vector<32x8xf32>, vector<8x128xf32>, vector<32x128xf32> -> vector<32x128xf32>
    %68 = arith.addf %60, %67 : vector<32x128xf32>
    %c0_45 = arith.constant 0 : index
    %c0_46 = arith.constant 0 : index
    %69 = vector.load %arg4[%c0_45, %c0_46] : memref<32x1xf32, #tpu.memory_space<vmem>>, vector<32x1xf32>
    %70 = vector.broadcast %69 : vector<32x1xf32> to vector<32x128xf32>
    %71 = arith.addf %68, %70 : vector<32x128xf32>
    %cst_47 = arith.constant 0.000000e+00 : f32
    %72 = vector.broadcast %cst_47 : f32 to vector<32x128xf32>
    %73 = arith.maximumf %71, %72 : vector<32x128xf32>
    %c4_48 = arith.constant 4 : index
    %c0_49 = arith.constant 0 : index
    %c0_50 = arith.constant 0 : index
    %74 = vector.load %arg5[%c4_48, %c0_49, %c0_50] : memref<9x32x32xf32, #tpu.memory_space<vmem>>, vector<1x32x32xf32>
    %75 = vector.shape_cast %74 : vector<1x32x32xf32> to vector<32x32xf32>
    %cst_51 = arith.constant dense<0.000000e+00> : vector<32x128xf32>
    %76 = tpu.matmul %75, %73, %cst_51 {dimension_numbers = #tpu.dot_dimension_numbers<[1], [0], [0], [1], [0, 0, 1, 1], [], []>} : vector<32x32xf32>, vector<32x128xf32>, vector<32x128xf32> -> vector<32x128xf32>
    %c9_i32_52 = arith.constant 9 : i32
    %77 = tpu.dynamic_rotate %73 by %c9_i32_52 dim 1 : vector<32x128xf32>, i32 -> vector<32x128xf32>
    %c0_53 = arith.constant 0 : index
    %c0_54 = arith.constant 0 : index
    %78 = vector.load %arg2[%c0_53, %c0_54] : memref<9x128xf32, #tpu.memory_space<vmem>>, vector<1x128xf32>
    %79 = vector.broadcast %78 : vector<1x128xf32> to vector<32x128xf32>
    %80 = arith.mulf %77, %79 : vector<32x128xf32>
    %c0_55 = arith.constant 0 : index
    %c0_56 = arith.constant 0 : index
    %c0_57 = arith.constant 0 : index
    %81 = vector.load %arg5[%c0_55, %c0_56, %c0_57] : memref<9x32x32xf32, #tpu.memory_space<vmem>>, vector<1x32x32xf32>
    %82 = vector.shape_cast %81 : vector<1x32x32xf32> to vector<32x32xf32>
    %cst_58 = arith.constant dense<0.000000e+00> : vector<32x128xf32>
    %83 = tpu.matmul %82, %80, %cst_58 {dimension_numbers = #tpu.dot_dimension_numbers<[1], [0], [0], [1], [0, 0, 1, 1], [], []>} : vector<32x32xf32>, vector<32x128xf32>, vector<32x128xf32> -> vector<32x128xf32>
    %84 = arith.addf %76, %83 : vector<32x128xf32>
    %c8_i32_59 = arith.constant 8 : i32
    %85 = tpu.dynamic_rotate %73 by %c8_i32_59 dim 1 : vector<32x128xf32>, i32 -> vector<32x128xf32>
    %c1_60 = arith.constant 1 : index
    %c0_61 = arith.constant 0 : index
    %86 = vector.load %arg2[%c1_60, %c0_61] : memref<9x128xf32, #tpu.memory_space<vmem>>, vector<1x128xf32>
    %87 = vector.broadcast %86 : vector<1x128xf32> to vector<32x128xf32>
    %88 = arith.mulf %85, %87 : vector<32x128xf32>
    %c1_62 = arith.constant 1 : index
    %c0_63 = arith.constant 0 : index
    %c0_64 = arith.constant 0 : index
    %89 = vector.load %arg5[%c1_62, %c0_63, %c0_64] : memref<9x32x32xf32, #tpu.memory_space<vmem>>, vector<1x32x32xf32>
    %90 = vector.shape_cast %89 : vector<1x32x32xf32> to vector<32x32xf32>
    %cst_65 = arith.constant dense<0.000000e+00> : vector<32x128xf32>
    %91 = tpu.matmul %90, %88, %cst_65 {dimension_numbers = #tpu.dot_dimension_numbers<[1], [0], [0], [1], [0, 0, 1, 1], [], []>} : vector<32x32xf32>, vector<32x128xf32>, vector<32x128xf32> -> vector<32x128xf32>
    %92 = arith.addf %84, %91 : vector<32x128xf32>
    %c7_i32_66 = arith.constant 7 : i32
    %93 = tpu.dynamic_rotate %73 by %c7_i32_66 dim 1 : vector<32x128xf32>, i32 -> vector<32x128xf32>
    %c2_67 = arith.constant 2 : index
    %c0_68 = arith.constant 0 : index
    %94 = vector.load %arg2[%c2_67, %c0_68] : memref<9x128xf32, #tpu.memory_space<vmem>>, vector<1x128xf32>
    %95 = vector.broadcast %94 : vector<1x128xf32> to vector<32x128xf32>
    %96 = arith.mulf %93, %95 : vector<32x128xf32>
    %c2_69 = arith.constant 2 : index
    %c0_70 = arith.constant 0 : index
    %c0_71 = arith.constant 0 : index
    %97 = vector.load %arg5[%c2_69, %c0_70, %c0_71] : memref<9x32x32xf32, #tpu.memory_space<vmem>>, vector<1x32x32xf32>
    %98 = vector.shape_cast %97 : vector<1x32x32xf32> to vector<32x32xf32>
    %cst_72 = arith.constant dense<0.000000e+00> : vector<32x128xf32>
    %99 = tpu.matmul %98, %96, %cst_72 {dimension_numbers = #tpu.dot_dimension_numbers<[1], [0], [0], [1], [0, 0, 1, 1], [], []>} : vector<32x32xf32>, vector<32x128xf32>, vector<32x128xf32> -> vector<32x128xf32>
    %100 = arith.addf %92, %99 : vector<32x128xf32>
    %c1_i32_73 = arith.constant 1 : i32
    %101 = tpu.dynamic_rotate %73 by %c1_i32_73 dim 1 : vector<32x128xf32>, i32 -> vector<32x128xf32>
    %c3_74 = arith.constant 3 : index
    %c0_75 = arith.constant 0 : index
    %102 = vector.load %arg2[%c3_74, %c0_75] : memref<9x128xf32, #tpu.memory_space<vmem>>, vector<1x128xf32>
    %103 = vector.broadcast %102 : vector<1x128xf32> to vector<32x128xf32>
    %104 = arith.mulf %101, %103 : vector<32x128xf32>
    %c3_76 = arith.constant 3 : index
    %c0_77 = arith.constant 0 : index
    %c0_78 = arith.constant 0 : index
    %105 = vector.load %arg5[%c3_76, %c0_77, %c0_78] : memref<9x32x32xf32, #tpu.memory_space<vmem>>, vector<1x32x32xf32>
    %106 = vector.shape_cast %105 : vector<1x32x32xf32> to vector<32x32xf32>
    %cst_79 = arith.constant dense<0.000000e+00> : vector<32x128xf32>
    %107 = tpu.matmul %106, %104, %cst_79 {dimension_numbers = #tpu.dot_dimension_numbers<[1], [0], [0], [1], [0, 0, 1, 1], [], []>} : vector<32x32xf32>, vector<32x128xf32>, vector<32x128xf32> -> vector<32x128xf32>
    %108 = arith.addf %100, %107 : vector<32x128xf32>
    %c127_i32_80 = arith.constant 127 : i32
    %109 = tpu.dynamic_rotate %73 by %c127_i32_80 dim 1 : vector<32x128xf32>, i32 -> vector<32x128xf32>
    %c5_81 = arith.constant 5 : index
    %c0_82 = arith.constant 0 : index
    %110 = vector.load %arg2[%c5_81, %c0_82] : memref<9x128xf32, #tpu.memory_space<vmem>>, vector<1x128xf32>
    %111 = vector.broadcast %110 : vector<1x128xf32> to vector<32x128xf32>
    %112 = arith.mulf %109, %111 : vector<32x128xf32>
    %c5_83 = arith.constant 5 : index
    %c0_84 = arith.constant 0 : index
    %c0_85 = arith.constant 0 : index
    %113 = vector.load %arg5[%c5_83, %c0_84, %c0_85] : memref<9x32x32xf32, #tpu.memory_space<vmem>>, vector<1x32x32xf32>
    %114 = vector.shape_cast %113 : vector<1x32x32xf32> to vector<32x32xf32>
    %cst_86 = arith.constant dense<0.000000e+00> : vector<32x128xf32>
    %115 = tpu.matmul %114, %112, %cst_86 {dimension_numbers = #tpu.dot_dimension_numbers<[1], [0], [0], [1], [0, 0, 1, 1], [], []>} : vector<32x32xf32>, vector<32x128xf32>, vector<32x128xf32> -> vector<32x128xf32>
    %116 = arith.addf %108, %115 : vector<32x128xf32>
    %c121_i32_87 = arith.constant 121 : i32
    %117 = tpu.dynamic_rotate %73 by %c121_i32_87 dim 1 : vector<32x128xf32>, i32 -> vector<32x128xf32>
    %c6_88 = arith.constant 6 : index
    %c0_89 = arith.constant 0 : index
    %118 = vector.load %arg2[%c6_88, %c0_89] : memref<9x128xf32, #tpu.memory_space<vmem>>, vector<1x128xf32>
    %119 = vector.broadcast %118 : vector<1x128xf32> to vector<32x128xf32>
    %120 = arith.mulf %117, %119 : vector<32x128xf32>
    %c6_90 = arith.constant 6 : index
    %c0_91 = arith.constant 0 : index
    %c0_92 = arith.constant 0 : index
    %121 = vector.load %arg5[%c6_90, %c0_91, %c0_92] : memref<9x32x32xf32, #tpu.memory_space<vmem>>, vector<1x32x32xf32>
    %122 = vector.shape_cast %121 : vector<1x32x32xf32> to vector<32x32xf32>
    %cst_93 = arith.constant dense<0.000000e+00> : vector<32x128xf32>
    %123 = tpu.matmul %122, %120, %cst_93 {dimension_numbers = #tpu.dot_dimension_numbers<[1], [0], [0], [1], [0, 0, 1, 1], [], []>} : vector<32x32xf32>, vector<32x128xf32>, vector<32x128xf32> -> vector<32x128xf32>
    %124 = arith.addf %116, %123 : vector<32x128xf32>
    %c120_i32_94 = arith.constant 120 : i32
    %125 = tpu.dynamic_rotate %73 by %c120_i32_94 dim 1 : vector<32x128xf32>, i32 -> vector<32x128xf32>
    %c7_95 = arith.constant 7 : index
    %c0_96 = arith.constant 0 : index
    %126 = vector.load %arg2[%c7_95, %c0_96] : memref<9x128xf32, #tpu.memory_space<vmem>>, vector<1x128xf32>
    %127 = vector.broadcast %126 : vector<1x128xf32> to vector<32x128xf32>
    %128 = arith.mulf %125, %127 : vector<32x128xf32>
    %c7_97 = arith.constant 7 : index
    %c0_98 = arith.constant 0 : index
    %c0_99 = arith.constant 0 : index
    %129 = vector.load %arg5[%c7_97, %c0_98, %c0_99] : memref<9x32x32xf32, #tpu.memory_space<vmem>>, vector<1x32x32xf32>
    %130 = vector.shape_cast %129 : vector<1x32x32xf32> to vector<32x32xf32>
    %cst_100 = arith.constant dense<0.000000e+00> : vector<32x128xf32>
    %131 = tpu.matmul %130, %128, %cst_100 {dimension_numbers = #tpu.dot_dimension_numbers<[1], [0], [0], [1], [0, 0, 1, 1], [], []>} : vector<32x32xf32>, vector<32x128xf32>, vector<32x128xf32> -> vector<32x128xf32>
    %132 = arith.addf %124, %131 : vector<32x128xf32>
    %c119_i32_101 = arith.constant 119 : i32
    %133 = tpu.dynamic_rotate %73 by %c119_i32_101 dim 1 : vector<32x128xf32>, i32 -> vector<32x128xf32>
    %c8_102 = arith.constant 8 : index
    %c0_103 = arith.constant 0 : index
    %134 = vector.load %arg2[%c8_102, %c0_103] : memref<9x128xf32, #tpu.memory_space<vmem>>, vector<1x128xf32>
    %135 = vector.broadcast %134 : vector<1x128xf32> to vector<32x128xf32>
    %136 = arith.mulf %133, %135 : vector<32x128xf32>
    %c8_104 = arith.constant 8 : index
    %c0_105 = arith.constant 0 : index
    %c0_106 = arith.constant 0 : index
    %137 = vector.load %arg5[%c8_104, %c0_105, %c0_106] : memref<9x32x32xf32, #tpu.memory_space<vmem>>, vector<1x32x32xf32>
    %138 = vector.shape_cast %137 : vector<1x32x32xf32> to vector<32x32xf32>
    %cst_107 = arith.constant dense<0.000000e+00> : vector<32x128xf32>
    %139 = tpu.matmul %138, %136, %cst_107 {dimension_numbers = #tpu.dot_dimension_numbers<[1], [0], [0], [1], [0, 0, 1, 1], [], []>} : vector<32x32xf32>, vector<32x128xf32>, vector<32x128xf32> -> vector<32x128xf32>
    %140 = arith.addf %132, %139 : vector<32x128xf32>
    %c0_108 = arith.constant 0 : index
    %c0_109 = arith.constant 0 : index
    %141 = vector.load %arg6[%c0_108, %c0_109] : memref<32x1xf32, #tpu.memory_space<vmem>>, vector<32x1xf32>
    %142 = vector.broadcast %141 : vector<32x1xf32> to vector<32x128xf32>
    %143 = arith.addf %140, %142 : vector<32x128xf32>
    %cst_110 = arith.constant 0.000000e+00 : f32
    %144 = vector.broadcast %cst_110 : f32 to vector<32x128xf32>
    %145 = arith.maximumf %143, %144 : vector<32x128xf32>
    %c0_111 = arith.constant 0 : index
    %c0_112 = arith.constant 0 : index
    %146 = vector.load %arg7[%c0_111, %c0_112] : memref<3x32xf32, #tpu.memory_space<vmem>>, vector<3x32xf32>
    %cst_113 = arith.constant dense<0.000000e+00> : vector<3x128xf32>
    %147 = tpu.matmul %146, %145, %cst_113 {dimension_numbers = #tpu.dot_dimension_numbers<[1], [0], [0], [1], [0, 0, 1, 1], [], []>} : vector<3x32xf32>, vector<32x128xf32>, vector<3x128xf32> -> vector<3x128xf32>
    %c0_114 = arith.constant 0 : index
    %c0_115 = arith.constant 0 : index
    %c0_116 = arith.constant 0 : index
    %148 = vector.load %arg8[%c0_114, %c0_115, %c0_116] : memref<1x3x128xf32, #tpu.memory_space<vmem>>, vector<1x3x128xf32>
    %149 = vector.shape_cast %148 : vector<1x3x128xf32> to vector<3x128xf32>
    %150 = arith.addf %147, %149 : vector<3x128xf32>
    %c0_117 = arith.constant 0 : index
    %c0_118 = arith.constant 0 : index
    %c0_119 = arith.constant 0 : index
    %151 = vector.load %arg9[%c0_117, %c0_118, %c0_119] : memref<1x3x128xf32, #tpu.memory_space<vmem>>, vector<1x3x128xf32>
    %152 = vector.shape_cast %151 : vector<1x3x128xf32> to vector<3x128xf32>
    %153 = vector.shape_cast %150 : vector<3x128xf32> to vector<1x3x128xf32>
    tpu.vector_store %arg9[%c0_117, %c0_118, %c0_119], %153 {strides = array<i32>} : memref<1x3x128xf32, #tpu.memory_space<vmem>>, vector<1x3x128xf32>,
    return
  }
  func.func @transform_0(%arg0: i32) -> (i32, i32, i32) {
    %c0_i32 = arith.constant 0 : i32
    %c0_i32_0 = arith.constant 0 : i32
    %c0_i32_1 = arith.constant 0 : i32
    return %arg0, %c0_i32, %c0_i32_0 : i32, i32, i32
  }
  func.func @transform_1(%arg0: i32) -> (i32, i32) {
    %c0_i32 = arith.constant 0 : i32
    %c0_i32_0 = arith.constant 0 : i32
    %c0_i32_1 = arith.constant 0 : i32
    return %c0_i32, %c0_i32_0 : i32, i32
  }
  func.func @transform_2(%arg0: i32) -> (i32, i32, i32) {
    %c0_i32 = arith.constant 0 : i32
    %c0_i32_0 = arith.constant 0 : i32
    %c0_i32_1 = arith.constant 0 : i32
    %c0_i32_2 = arith.constant 0 : i32
    return %c0_i32, %c0_i32_0, %c0_i32_1 : i32, i32, i32
  }
  func.func @transform_3(%arg0: i32) -> (i32, i32) {
    %c0_i32 = arith.constant 0 : i32
    %c0_i32_0 = arith.constant 0 : i32
    %c0_i32_1 = arith.constant 0 : i32
    return %c0_i32, %c0_i32_0 : i32, i32
  }
  func.func @transform_4(%arg0: i32) -> (i32, i32, i32) {
    %c0_i32 = arith.constant 0 : i32
    %c0_i32_0 = arith.constant 0 : i32
    %c0_i32_1 = arith.constant 0 : i32
    %c0_i32_2 = arith.constant 0 : i32
    return %c0_i32, %c0_i32_0, %c0_i32_1 : i32, i32, i32
  }
  func.func @transform_5(%arg0: i32) -> (i32, i32) {
    %c0_i32 = arith.constant 0 : i32
    %c0_i32_0 = arith.constant 0 : i32
    %c0_i32_1 = arith.constant 0 : i32
    return %c0_i32, %c0_i32_0 : i32, i32
  }
  func.func @transform_6(%arg0: i32) -> (i32, i32) {
    %c0_i32 = arith.constant 0 : i32
    %c0_i32_0 = arith.constant 0 : i32
    %c0_i32_1 = arith.constant 0 : i32
    return %c0_i32, %c0_i32_0 : i32, i32
  }
  func.func @transform_7(%arg0: i32) -> (i32, i32, i32) {
    %c0_i32 = arith.constant 0 : i32
    %c0_i32_0 = arith.constant 0 : i32
    %c0_i32_1 = arith.constant 0 : i32
    return %arg0, %c0_i32, %c0_i32_0 : i32, i32, i32
  }
  func.func @transform_8(%arg0: i32) -> (i32, i32, i32) {
    %c0_i32 = arith.constant 0 : i32
    %c0_i32_0 = arith.constant 0 : i32
    %c0_i32_1 = arith.constant 0 : i32
    return %arg0, %c0_i32, %c0_i32_0 : i32, i32, i32
  }
}

</mosaic_0001>

<llo_original>
// kernel: embedding_forward_pallas.1
$region0: #{embedding_forward_pallas.1}
  #allocation0 [shape = 'u32[]', space=smem, size = 0x4, offset = 0x4, fixed_abs, tag = 'smem constant byte address 0x4 - core index']
  #allocation1 [shape = 'u32[72,128]{1,0:T(1,128)}', space=vmem, size = 0x9000, scoped, tag = 'internal scratch']
  %s0 = inlined_call_operand.vmem [shape: f32[1,8,128], index: 0, kind: input, shape index: {}]
  %s1 = inlined_call_operand.vmem [shape: f32[9,128], index: 1, kind: input, shape index: {}]
  %s2 = inlined_call_operand.vmem [shape: f32[9,32,8], index: 2, kind: input, shape index: {}]
  %s3 = inlined_call_operand.vmem [shape: f32[32,1], index: 3, kind: input, shape index: {}]
  %s4 = inlined_call_operand.vmem [shape: f32[9,32,32], index: 4, kind: input, shape index: {}]
  %s5 = inlined_call_operand.vmem [shape: f32[32,1], index: 5, kind: input, shape index: {}]
  %s6 = inlined_call_operand.vmem [shape: f32[3,32], index: 6, kind: input, shape index: {}]
  %s7 = inlined_call_operand.vmem [shape: f32[1,3,128], index: 7, kind: input, shape index: {}]
  %s8 = inlined_call_operand.vmem [shape: f32[1,3,128], index: 8, kind: output, shape index: {}]
  %s9 = sld [smem:[#allocation0]]
  $region42: #{embedding_forward_pallas.1} parent=0
    _
  %s11 = ssub.s32 1, %s9
  %s12 = scalar_select 0, %s11, %s9
  // Predicated region
  $region2: #{embedding_forward_pallas.1} parent=0 // pred_check
    _
  $region3: #{embedding_forward_pallas.1} parent=0 // pred_check_branch
    %14 = sbr.rel (0) target = $region5
  $region4: #{embedding_forward_pallas.1} parent=0 // pred_region
    _
  $region5: #{embedding_forward_pallas.1} parent=0 // pred_fallthru
    _
  // Predicated region
  $region6: #{embedding_forward_pallas.1} parent=0 // pred_check
    _
  $region7: #{embedding_forward_pallas.1} parent=0 // pred_check_branch
    %16 = sbr.rel (0) target = $region9
  $region8: #{embedding_forward_pallas.1} parent=0 // pred_region
    _
  $region9: #{embedding_forward_pallas.1} parent=0 // pred_fallthru
    _
  // Predicated region
  $region10: #{embedding_forward_pallas.1} parent=0 // pred_check
    _
  $region11: #{embedding_forward_pallas.1} parent=0 // pred_check_branch
    %18 = sbr.rel (0) target = $region13
  $region12: #{embedding_forward_pallas.1} parent=0 // pred_region
    _
  $region13: #{embedding_forward_pallas.1} parent=0 // pred_fallthru
    _
  // Predicated region
  $region14: #{embedding_forward_pallas.1} parent=0 // pred_check
    _
  $region15: #{embedding_forward_pallas.1} parent=0 // pred_check_branch
    %20 = sbr.rel (0) target = $region17
  $region16: #{embedding_forward_pallas.1} parent=0 // pred_region
    _
  $region17: #{embedding_forward_pallas.1} parent=0 // pred_fallthru
    _
  // Predicated region
  $region18: #{embedding_forward_pallas.1} parent=0 // pred_check
    _
  $region19: #{embedding_forward_pallas.1} parent=0 // pred_check_branch
    %22 = sbr.rel (0) target = $region21
  $region20: #{embedding_forward_pallas.1} parent=0 // pred_region
    _
  $region21: #{embedding_forward_pallas.1} parent=0 // pred_fallthru
    _
  // Predicated region
  $region22: #{embedding_forward_pallas.1} parent=0 // pred_check
    _
  $region23: #{embedding_forward_pallas.1} parent=0 // pred_check_branch
    %24 = sbr.rel (0) target = $region25
  $region24: #{embedding_forward_pallas.1} parent=0 // pred_region
    _
  $region25: #{embedding_forward_pallas.1} parent=0 // pred_fallthru
    _
  // Predicated region
  $region26: #{embedding_forward_pallas.1} parent=0 // pred_check
    _
  $region27: #{embedding_forward_pallas.1} parent=0 // pred_check_branch
    %26 = sbr.rel (0) target = $region29
  $region28: #{embedding_forward_pallas.1} parent=0 // pred_region
    _
  $region29: #{embedding_forward_pallas.1} parent=0 // pred_fallthru
    _
  // Predicated region
  $region30: #{embedding_forward_pallas.1} parent=0 // pred_check
    _
  $region31: #{embedding_forward_pallas.1} parent=0 // pred_check_branch
    %28 = sbr.rel (0) target = $region33
  $region32: #{embedding_forward_pallas.1} parent=0 // pred_region
    _
  $region33: #{embedding_forward_pallas.1} parent=0 // pred_fallthru
    _
  %v29 = vld [vmem:[%s0] sm:$0xff]
  %s30 = scalar_lea.vmem %s2, 128
  %v31 = vld [vmem:[%s30] sm:$0xff]
  %v32 = vld [vmem:[%s30 + $0x8] sm:$0xff]
  %v33 = vld [vmem:[%s30 + $0x10] sm:$0xff]
  %v34 = vld [vmem:[%s30 + $0x18] sm:$0xff]
  %35 = vrot.lane.b32.xlu0 %v29, 9
  %v36 = vpop.permute.xlu0 %35
  %v37 = vld [vmem:[%s1] sm:$0x1]
  %v38 = vperm.slane %v37, 0
  %v39 = vmul.f32 %v36, %v38
  %v40 = vld [vmem:[%s2] sm:$0xff]
  %v41 = vld [vmem:[%s2 + $0x8] sm:$0xff]
  %v42 = vld [vmem:[%s2 + $0x10] sm:$0xff]
  %v43 = vld [vmem:[%s2 + $0x18] sm:$0xff]
  %vm44 = vcmask 64512
  %v46 = vsel %vm44, %v40, 0
  %v49 = vsel %vm44, %v41, 0
  %v52 = vsel %vm44, %v42, 0
  %v55 = vsel %vm44, %v43, 0
  %57 = vmatpush.msra.mxu0 0.0
  %58 = vmatpush.msra.mxu0 0.0
  %59 = vmatpush.msra.mxu0 0.0
  %60 = vmatpush.msra.mxu0 0.0
  %61 = vmatpush.msra.mxu0 0.0
  %62 = vmatpush.msra.mxu0 0.0
  %63 = vmatpush.msra.mxu0 0.0
  %64 = vmatpush.msra.mxu0 0.0
  %65 = vmatpush.msra.mxu0 0.0
  %66 = vmatpush.msra.mxu0 0.0
  %67 = vmatpush.msra.mxu0 0.0
  %68 = vmatpush.msra.mxu0 0.0
  %69 = vmatpush.msra.mxu0 0.0
  %70 = vmatpush.msra.mxu0 0.0
  %71 = vmatpush.msra.mxu0 0.0
  %72 = vmatpush.msra.mxu0 %v39
  %73 = vmatmul.f32.gmra.mxu0 %v46
  %v74 = vpop.f32.mrf.mxu0
  %v75 = vadd.f32 0.0, %v74
  %76 = vmatmul.f32.gmra.mxu0 %v49
  %v77 = vpop.f32.mrf.mxu0
  %v78 = vadd.f32 0.0, %v77
  %79 = vmatmul.f32.gmra.mxu0 %v52
  %v80 = vpop.f32.mrf.mxu0
  %v81 = vadd.f32 0.0, %v80
  %82 = vmatmul.f32.gmra.mxu0 %v55
  %v83 = vpop.f32.mrf.mxu0
  %v84 = vadd.f32 0.0, %v83
  %85 = vdwg.mxu0
  %v87 = vsel %vm44, %v31, 0
  %v90 = vsel %vm44, %v32, 0
  %v93 = vsel %vm44, %v33, 0
  %v96 = vsel %vm44, %v34, 0
  %98 = vmatpush.msra.mxu0 0.0
  %99 = vmatpush.msra.mxu0 0.0
  %100 = vmatpush.msra.mxu0 0.0
  %101 = vmatpush.msra.mxu0 0.0
  %102 = vmatpush.msra.mxu0 0.0
  %103 = vmatpush.msra.mxu0 0.0
  %104 = vmatpush.msra.mxu0 0.0
  %105 = vmatpush.msra.mxu0 0.0
  %106 = vmatpush.msra.mxu0 0.0
  %107 = vmatpush.msra.mxu0 0.0
  %108 = vmatpush.msra.mxu0 0.0
  %109 = vmatpush.msra.mxu0 0.0
  %110 = vmatpush.msra.mxu0 0.0
  %111 = vmatpush.msra.mxu0 0.0
  %112 = vmatpush.msra.mxu0 0.0
  %113 = vmatpush.msra.mxu0 %v29
  %114 = vmatmul.f32.gmra.mxu0 %v87
  %v115 = vpop.f32.mrf.mxu0
  %v116 = vadd.f32 %v75, %v115
  %117 = vmatmul.f32.gmra.mxu0 %v90
  %v118 = vpop.f32.mrf.mxu0
  %v119 = vadd.f32 %v78, %v118
  %120 = vmatmul.f32.gmra.mxu0 %v93
  %v121 = vpop.f32.mrf.mxu0
  %v122 = vadd.f32 %v81, %v121
  %123 = vmatmul.f32.gmra.mxu0 %v96
  %v124 = vpop.f32.mrf.mxu0
  %v125 = vadd.f32 %v84, %v124
  %126 = vdwg.mxu0
  %127 = vrot.lane.b32.xlu0 %v29, 8
  %v128 = vpop.permute.xlu0 %127
  %v129 = vld [vmem:[%s1 + $0x1] sm:$0x1]
  %v130 = vperm.slane %v129, 0
  %v131 = vmul.f32 %v128, %v130
  %s132 = scalar_lea.vmem %s2, 32
  %v133 = vld [vmem:[%s132] sm:$0xff]
  %v134 = vld [vmem:[%s132 + $0x8] sm:$0xff]
  %v135 = vld [vmem:[%s132 + $0x10] sm:$0xff]
  %v136 = vld [vmem:[%s132 + $0x18] sm:$0xff]
  %v138 = vsel %vm44, %v133, 0
  %v141 = vsel %vm44, %v134, 0
  %v144 = vsel %vm44, %v135, 0
  %v147 = vsel %vm44, %v136, 0
  %149 = vmatpush.msra.mxu0 0.0
  %150 = vmatpush.msra.mxu0 0.0
  %151 = vmatpush.msra.mxu0 0.0
  %152 = vmatpush.msra.mxu0 0.0
  %153 = vmatpush.msra.mxu0 0.0
  %154 = vmatpush.msra.mxu0 0.0
  %155 = vmatpush.msra.mxu0 0.0
  %156 = vmatpush.msra.mxu0 0.0
  %157 = vmatpush.msra.mxu0 0.0
  %158 = vmatpush.msra.mxu0 0.0
  %159 = vmatpush.msra.mxu0 0.0
  %160 = vmatpush.msra.mxu0 0.0
  %161 = vmatpush.msra.mxu0 0.0
  %162 = vmatpush.msra.mxu0 0.0
  %163 = vmatpush.msra.mxu0 0.0
  %164 = vmatpush.msra.mxu0 %v131
  %165 = vmatmul.f32.gmra.mxu0 %v138
  %v166 = vpop.f32.mrf.mxu0
  %v167 = vadd.f32 0.0, %v166
  %168 = vmatmul.f32.gmra.mxu0 %v141
  %v169 = vpop.f32.mrf.mxu0
  %v170 = vadd.f32 0.0, %v169
  %171 = vmatmul.f32.gmra.mxu0 %v144
  %v172 = vpop.f32.mrf.mxu0
  %v173 = vadd.f32 0.0, %v172
  %174 = vmatmul.f32.gmra.mxu0 %v147
  %v175 = vpop.f32.mrf.mxu0
  %v176 = vadd.f32 0.0, %v175
  %177 = vdwg.mxu0
  %v178 = vadd.f32 %v116, %v167
  %v179 = vadd.f32 %v119, %v170
  %v180 = vadd.f32 %v122, %v173
  %v181 = vadd.f32 %v125, %v176
  %182 = vrot.lane.b32.xlu0 %v29, 7
  %v183 = vpop.permute.xlu0 %182
  %v184 = vld [vmem:[%s1 + $0x2] sm:$0x1]
  %v185 = vperm.slane %v184, 0
  %v186 = vmul.f32 %v183, %v185
  %s187 = scalar_lea.vmem %s2, 64
  %v188 = vld [vmem:[%s187] sm:$0xff]
  %v189 = vld [vmem:[%s187 + $0x8] sm:$0xff]
  %v190 = vld [vmem:[%s187 + $0x10] sm:$0xff]
  %v191 = vld [vmem:[%s187 + $0x18] sm:$0xff]
  %v193 = vsel %vm44, %v188, 0
  %v196 = vsel %vm44, %v189, 0
  %v199 = vsel %vm44, %v190, 0
  %v202 = vsel %vm44, %v191, 0
  %204 = vmatpush.msra.mxu0 0.0
  %205 = vmatpush.msra.mxu0 0.0
  %206 = vmatpush.msra.mxu0 0.0
  %207 = vmatpush.msra.mxu0 0.0
  %208 = vmatpush.msra.mxu0 0.0
  %209 = vmatpush.msra.mxu0 0.0
  %210 = vmatpush.msra.mxu0 0.0
  %211 = vmatpush.msra.mxu0 0.0
  %212 = vmatpush.msra.mxu0 0.0
  %213 = vmatpush.msra.mxu0 0.0
  %214 = vmatpush.msra.mxu0 0.0
  %215 = vmatpush.msra.mxu0 0.0
  %216 = vmatpush.msra.mxu0 0.0
  %217 = vmatpush.msra.mxu0 0.0
  %218 = vmatpush.msra.mxu0 0.0
  %219 = vmatpush.msra.mxu0 %v186
  %220 = vmatmul.f32.gmra.mxu0 %v193
  %v221 = vpop.f32.mrf.mxu0
  %v222 = vadd.f32 0.0, %v221
  %223 = vmatmul.f32.gmra.mxu0 %v196
  %v224 = vpop.f32.mrf.mxu0
  %v225 = vadd.f32 0.0, %v224
  %226 = vmatmul.f32.gmra.mxu0 %v199
  %v227 = vpop.f32.mrf.mxu0
  %v228 = vadd.f32 0.0, %v227
  %229 = vmatmul.f32.gmra.mxu0 %v202
  %v230 = vpop.f32.mrf.mxu0
  %v231 = vadd.f32 0.0, %v230
  %232 = vdwg.mxu0
  %v233 = vadd.f32 %v178, %v222
  %v234 = vadd.f32 %v179, %v225
  %v235 = vadd.f32 %v180, %v228
  %v236 = vadd.f32 %v181, %v231
  %237 = vrot.lane.b32.xlu0 %v29, 1
  %v238 = vpop.permute.xlu0 %237
  %v239 = vld [vmem:[%s1 + $0x3] sm:$0x1]
  %v240 = vperm.slane %v239, 0
  %v241 = vmul.f32 %v238, %v240
  %s242 = scalar_lea.vmem %s2, 96
  %v243 = vld [vmem:[%s242] sm:$0xff]
  %v244 = vld [vmem:[%s242 + $0x8] sm:$0xff]
  %v245 = vld [vmem:[%s242 + $0x10] sm:$0xff]
  %v246 = vld [vmem:[%s242 + $0x18] sm:$0xff]
  %v248 = vsel %vm44, %v243, 0
  %v251 = vsel %vm44, %v244, 0
  %v254 = vsel %vm44, %v245, 0
  %v257 = vsel %vm44, %v246, 0
  %259 = vmatpush.msra.mxu0 0.0
  %260 = vmatpush.msra.mxu0 0.0
  %261 = vmatpush.msra.mxu0 0.0
  %262 = vmatpush.msra.mxu0 0.0
  %263 = vmatpush.msra.mxu0 0.0
  %264 = vmatpush.msra.mxu0 0.0
  %265 = vmatpush.msra.mxu0 0.0
  %266 = vmatpush.msra.mxu0 0.0
  %267 = vmatpush.msra.mxu0 0.0
  %268 = vmatpush.msra.mxu0 0.0
  %269 = vmatpush.msra.mxu0 0.0
  %270 = vmatpush.msra.mxu0 0.0
  %271 = vmatpush.msra.mxu0 0.0
  %272 = vmatpush.msra.mxu0 0.0
  %273 = vmatpush.msra.mxu0 0.0
  %274 = vmatpush.msra.mxu0 %v241
  %275 = vmatmul.f32.gmra.mxu0 %v248
  %v276 = vpop.f32.mrf.mxu0
  %v277 = vadd.f32 0.0, %v276
  %278 = vmatmul.f32.gmra.mxu0 %v251
  %v279 = vpop.f32.mrf.mxu0
  %v280 = vadd.f32 0.0, %v279
  %281 = vmatmul.f32.gmra.mxu0 %v254
  %v282 = vpop.f32.mrf.mxu0
  %v283 = vadd.f32 0.0, %v282
  %284 = vmatmul.f32.gmra.mxu0 %v257
  %v285 = vpop.f32.mrf.mxu0
  %v286 = vadd.f32 0.0, %v285
  %287 = vdwg.mxu0
  %v288 = vadd.f32 %v233, %v277
  %v289 = vadd.f32 %v234, %v280
  %v290 = vadd.f32 %v235, %v283
  %v291 = vadd.f32 %v236, %v286
  %292 = vrot.lane.b32.xlu0 %v29, 127
  %v293 = vpop.permute.xlu0 %292
  %v294 = vld [vmem:[%s1 + $0x5] sm:$0x1]
  %v295 = vperm.slane %v294, 0
  %v296 = vmul.f32 %v293, %v295
  %s297 = scalar_lea.vmem %s2, 160
  %v298 = vld [vmem:[%s297] sm:$0xff]
  %v299 = vld [vmem:[%s297 + $0x8] sm:$0xff]
  %v300 = vld [vmem:[%s297 + $0x10] sm:$0xff]
  %v301 = vld [vmem:[%s297 + $0x18] sm:$0xff]
  %v303 = vsel %vm44, %v298, 0
  %v306 = vsel %vm44, %v299, 0
  %v309 = vsel %vm44, %v300, 0
  %v312 = vsel %vm44, %v301, 0
  %314 = vmatpush.msra.mxu0 0.0
  %315 = vmatpush.msra.mxu0 0.0
  %316 = vmatpush.msra.mxu0 0.0
  %317 = vmatpush.msra.mxu0 0.0
  %318 = vmatpush.msra.mxu0 0.0
  %319 = vmatpush.msra.mxu0 0.0
  %320 = vmatpush.msra.mxu0 0.0
  %321 = vmatpush.msra.mxu0 0.0
  %322 = vmatpush.msra.mxu0 0.0
  %323 = vmatpush.msra.mxu0 0.0
  %324 = vmatpush.msra.mxu0 0.0
  %325 = vmatpush.msra.mxu0 0.0
  %326 = vmatpush.msra.mxu0 0.0
  %327 = vmatpush.msra.mxu0 0.0
  %328 = vmatpush.msra.mxu0 0.0
  %329 = vmatpush.msra.mxu0 %v296
  %330 = vmatmul.f32.gmra.mxu0 %v303
  %v331 = vpop.f32.mrf.mxu0
  %v332 = vadd.f32 0.0, %v331
  %333 = vmatmul.f32.gmra.mxu0 %v306
  %v334 = vpop.f32.mrf.mxu0
  %v335 = vadd.f32 0.0, %v334
  %336 = vmatmul.f32.gmra.mxu0 %v309
  %v337 = vpop.f32.mrf.mxu0
  %v338 = vadd.f32 0.0, %v337
  %339 = vmatmul.f32.gmra.mxu0 %v312
  %v340 = vpop.f32.mrf.mxu0
  %v341 = vadd.f32 0.0, %v340
  %342 = vdwg.mxu0
  %v343 = vadd.f32 %v288, %v332
  %v344 = vadd.f32 %v289, %v335
  %v345 = vadd.f32 %v290, %v338
  %v346 = vadd.f32 %v291, %v341
  %347 = vrot.lane.b32.xlu0 %v29, 121
  %v348 = vpop.permute.xlu0 %347
  %v349 = vld [vmem:[%s1 + $0x6] sm:$0x1]
  %v350 = vperm.slane %v349, 0
  %v351 = vmul.f32 %v348, %v350
  %s352 = scalar_lea.vmem %s2, 192
  %v353 = vld [vmem:[%s352] sm:$0xff]
  %v354 = vld [vmem:[%s352 + $0x8] sm:$0xff]
  %v355 = vld [vmem:[%s352 + $0x10] sm:$0xff]
  %v356 = vld [vmem:[%s352 + $0x18] sm:$0xff]
  %v358 = vsel %vm44, %v353, 0
  %v361 = vsel %vm44, %v354, 0
  %v364 = vsel %vm44, %v355, 0
  %v367 = vsel %vm44, %v356, 0
  %369 = vmatpush.msra.mxu0 0.0
  %370 = vmatpush.msra.mxu0 0.0
  %371 = vmatpush.msra.mxu0 0.0
  %372 = vmatpush.msra.mxu0 0.0
  %373 = vmatpush.msra.mxu0 0.0
  %374 = vmatpush.msra.mxu0 0.0
  %375 = vmatpush.msra.mxu0 0.0
  %376 = vmatpush.msra.mxu0 0.0
  %377 = vmatpush.msra.mxu0 0.0
  %378 = vmatpush.msra.mxu0 0.0
  %379 = vmatpush.msra.mxu0 0.0
  %380 = vmatpush.msra.mxu0 0.0
  %381 = vmatpush.msra.mxu0 0.0
  %382 = vmatpush.msra.mxu0 0.0
  %383 = vmatpush.msra.mxu0 0.0
  %384 = vmatpush.msra.mxu0 %v351
  %385 = vmatmul.f32.gmra.mxu0 %v358
  %v386 = vpop.f32.mrf.mxu0
  %v387 = vadd.f32 0.0, %v386
  %388 = vmatmul.f32.gmra.mxu0 %v361
  %v389 = vpop.f32.mrf.mxu0
  %v390 = vadd.f32 0.0, %v389
  %391 = vmatmul.f32.gmra.mxu0 %v364
  %v392 = vpop.f32.mrf.mxu0
  %v393 = vadd.f32 0.0, %v392
  %394 = vmatmul.f32.gmra.mxu0 %v367
  %v395 = vpop.f32.mrf.mxu0
  %v396 = vadd.f32 0.0, %v395
  %397 = vdwg.mxu0
  %v398 = vadd.f32 %v343, %v387
  %v399 = vadd.f32 %v344, %v390
  %v400 = vadd.f32 %v345, %v393
  %v401 = vadd.f32 %v346, %v396
  %402 = vrot.lane.b32.xlu0 %v29, 120
  %v403 = vpop.permute.xlu0 %402
  %v404 = vld [vmem:[%s1 + $0x7] sm:$0x1]
  %v405 = vperm.slane %v404, 0
  %v406 = vmul.f32 %v403, %v405
  %s407 = scalar_lea.vmem %s2, 224
  %v408 = vld [vmem:[%s407] sm:$0xff]
  %v409 = vld [vmem:[%s407 + $0x8] sm:$0xff]
  %v410 = vld [vmem:[%s407 + $0x10] sm:$0xff]
  %v411 = vld [vmem:[%s407 + $0x18] sm:$0xff]
  %v413 = vsel %vm44, %v408, 0
  %v416 = vsel %vm44, %v409, 0
  %v419 = vsel %vm44, %v410, 0
  %v422 = vsel %vm44, %v411, 0
  %424 = vmatpush.msra.mxu0 0.0
  %425 = vmatpush.msra.mxu0 0.0
  %426 = vmatpush.msra.mxu0 0.0
  %427 = vmatpush.msra.mxu0 0.0
  %428 = vmatpush.msra.mxu0 0.0
  %429 = vmatpush.msra.mxu0 0.0
  %430 = vmatpush.msra.mxu0 0.0
  %431 = vmatpush.msra.mxu0 0.0
  %432 = vmatpush.msra.mxu0 0.0
  %433 = vmatpush.msra.mxu0 0.0
  %434 = vmatpush.msra.mxu0 0.0
  %435 = vmatpush.msra.mxu0 0.0
  %436 = vmatpush.msra.mxu0 0.0
  %437 = vmatpush.msra.mxu0 0.0
  %438 = vmatpush.msra.mxu0 0.0
  %439 = vmatpush.msra.mxu0 %v406
  %440 = vmatmul.f32.gmra.mxu0 %v413
  %v441 = vpop.f32.mrf.mxu0
  %v442 = vadd.f32 0.0, %v441
  %443 = vmatmul.f32.gmra.mxu0 %v416
  %v444 = vpop.f32.mrf.mxu0
  %v445 = vadd.f32 0.0, %v444
  %446 = vmatmul.f32.gmra.mxu0 %v419
  %v447 = vpop.f32.mrf.mxu0
  %v448 = vadd.f32 0.0, %v447
  %449 = vmatmul.f32.gmra.mxu0 %v422
  %v450 = vpop.f32.mrf.mxu0
  %v451 = vadd.f32 0.0, %v450
  %452 = vdwg.mxu0
  %v453 = vadd.f32 %v398, %v442
  %v454 = vadd.f32 %v399, %v445
  %v455 = vadd.f32 %v400, %v448
  %v456 = vadd.f32 %v401, %v451
  %457 = vrot.lane.b32.xlu0 %v29, 119
  %v458 = vpop.permute.xlu0 %457
  %v459 = vld [vmem:[%s1 + $0x8] sm:$0x1]
  %v460 = vperm.slane %v459, 0
  %v461 = vmul.f32 %v458, %v460
  %s462 = scalar_lea.vmem %s2, 256
  %v463 = vld [vmem:[%s462] sm:$0xff]
  %v464 = vld [vmem:[%s462 + $0x8] sm:$0xff]
  %v465 = vld [vmem:[%s462 + $0x10] sm:$0xff]
  %v466 = vld [vmem:[%s462 + $0x18] sm:$0xff]
  %v468 = vsel %vm44, %v463, 0
  %v471 = vsel %vm44, %v464, 0
  %v474 = vsel %vm44, %v465, 0
  %v477 = vsel %vm44, %v466, 0
  %479 = vmatpush.msra.mxu0 0.0
  %480 = vmatpush.msra.mxu0 0.0
  %481 = vmatpush.msra.mxu0 0.0
  %482 = vmatpush.msra.mxu0 0.0
  %483 = vmatpush.msra.mxu0 0.0
  %484 = vmatpush.msra.mxu0 0.0
  %485 = vmatpush.msra.mxu0 0.0
  %486 = vmatpush.msra.mxu0 0.0
  %487 = vmatpush.msra.mxu0 0.0
  %488 = vmatpush.msra.mxu0 0.0
  %489 = vmatpush.msra.mxu0 0.0
  %490 = vmatpush.msra.mxu0 0.0
  %491 = vmatpush.msra.mxu0 0.0
  %492 = vmatpush.msra.mxu0 0.0
  %493 = vmatpush.msra.mxu0 0.0
  %494 = vmatpush.msra.mxu0 %v461
  %495 = vmatmul.f32.gmra.mxu0 %v468
  %v496 = vpop.f32.mrf.mxu0
  %v497 = vadd.f32 0.0, %v496
  %498 = vmatmul.f32.gmra.mxu0 %v471
  %v499 = vpop.f32.mrf.mxu0
  %v500 = vadd.f32 0.0, %v499
  %501 = vmatmul.f32.gmra.mxu0 %v474
  %v502 = vpop.f32.mrf.mxu0
  %v503 = vadd.f32 0.0, %v502
  %504 = vmatmul.f32.gmra.mxu0 %v477
  %v505 = vpop.f32.mrf.mxu0
  %v506 = vadd.f32 0.0, %v505
  %507 = vdwg.mxu0
  %v508 = vadd.f32 %v453, %v497
  %v509 = vadd.f32 %v454, %v500
  %v510 = vadd.f32 %v455, %v503
  %v511 = vadd.f32 %v456, %v506
  %v512 = vld [vmem:[%s3] sm:$0xff]
  %v513 = vld [vmem:[%s3 + $0x8] sm:$0xff]
  %v514 = vld [vmem:[%s3 + $0x10] sm:$0xff]
  %v515 = vld [vmem:[%s3 + $0x18] sm:$0xff]
  %517 = vset.pattern.permute.xlu0 0
  %518 = vperm.xlu0 %517, %v512
  %v519 = vpop.permute.xlu0 %518
  %522 = vset.pattern.permute.xlu0 0
  %523 = vperm.xlu0 %522, %v513
  %v524 = vpop.permute.xlu0 %523
  %527 = vset.pattern.permute.xlu0 0
  %528 = vperm.xlu0 %527, %v514
  %v529 = vpop.permute.xlu0 %528
  %532 = vset.pattern.permute.xlu0 0
  %533 = vperm.xlu0 %532, %v515
  %v534 = vpop.permute.xlu0 %533
  %v536 = vadd.f32 %v508, %v519
  %v537 = vadd.f32 %v509, %v524
  %v538 = vadd.f32 %v510, %v529
  %v539 = vadd.f32 %v511, %v534
  %v540 = vmax.f32 %v536, 0.0
  %v541 = vmax.f32 %v537, 0.0
  %v542 = vmax.f32 %v538, 0.0
  %v543 = vmax.f32 %v539, 0.0
  %s544 = scalar_lea.vmem %s4, 128
  %v545 = vld [vmem:[%s544] sm:$0xff]
  %v546 = vld [vmem:[%s544 + $0x8] sm:$0xff]
  %v547 = vld [vmem:[%s544 + $0x10] sm:$0xff]
  %v548 = vld [vmem:[%s544 + $0x18] sm:$0xff]
  %549 = vrot.lane.b32.xlu0 %v540, 9
  %v550 = vpop.permute.xlu0 %549
  %551 = vrot.lane.b32.xlu0 %v541, 9
  %v552 = vpop.permute.xlu0 %551
  %553 = vrot.lane.b32.xlu0 %v542, 9
  %v554 = vpop.permute.xlu0 %553
  %555 = vrot.lane.b32.xlu0 %v543, 9
  %v556 = vpop.permute.xlu0 %555
  %v557 = vmul.f32 %v550, %v38
  %v558 = vmul.f32 %v552, %v38
  %v559 = vmul.f32 %v554, %v38
  %v560 = vmul.f32 %v556, %v38
  %v561 = vld [vmem:[%s4] sm:$0xff]
  %v562 = vld [vmem:[%s4 + $0x8] sm:$0xff]
  %v563 = vld [vmem:[%s4 + $0x10] sm:$0xff]
  %v564 = vld [vmem:[%s4 + $0x18] sm:$0xff]
  %vm565 = vcmask 261120
  %v567 = vsel %vm565, %v561, 0
  %v570 = vsel %vm565, %v562, 0
  %v573 = vsel %vm565, %v563, 0
  %v576 = vsel %vm565, %v564, 0
  %578 = vmatpush.msra.mxu0 0.0
  %579 = vmatpush.msra.mxu0 0.0
  %580 = vmatpush.msra.mxu0 0.0
  %581 = vmatpush.msra.mxu0 0.0
  %582 = vmatpush.msra.mxu0 0.0
  %583 = vmatpush.msra.mxu0 0.0
  %584 = vmatpush.msra.mxu0 0.0
  %585 = vmatpush.msra.mxu0 0.0
  %586 = vmatpush.msra.mxu0 0.0
  %587 = vmatpush.msra.mxu0 0.0
  %588 = vmatpush.msra.mxu0 0.0
  %589 = vmatpush.msra.mxu0 0.0
  %590 = vmatpush.msra.mxu0 %v560
  %591 = vmatpush.msra.mxu0 %v559
  %592 = vmatpush.msra.mxu0 %v558
  %593 = vmatpush.msra.mxu0 %v557
  %594 = vmatmul.f32.gmra.mxu0 %v567
  %v595 = vpop.f32.mrf.mxu0
  %v596 = vadd.f32 0.0, %v595
  %597 = vmatmul.f32.gmra.mxu0 %v570
  %v598 = vpop.f32.mrf.mxu0
  %v599 = vadd.f32 0.0, %v598
  %600 = vmatmul.f32.gmra.mxu0 %v573
  %v601 = vpop.f32.mrf.mxu0
  %v602 = vadd.f32 0.0, %v601
  %603 = vmatmul.f32.gmra.mxu0 %v576
  %v604 = vpop.f32.mrf.mxu0
  %v605 = vadd.f32 0.0, %v604
  %606 = vdwg.mxu0
  %v608 = vsel %vm565, %v545, 0
  %v611 = vsel %vm565, %v546, 0
  %v614 = vsel %vm565, %v547, 0
  %v617 = vsel %vm565, %v548, 0
  %619 = vmatpush.msra.mxu0 0.0
  %620 = vmatpush.msra.mxu0 0.0
  %621 = vmatpush.msra.mxu0 0.0
  %622 = vmatpush.msra.mxu0 0.0
  %623 = vmatpush.msra.mxu0 0.0
  %624 = vmatpush.msra.mxu0 0.0
  %625 = vmatpush.msra.mxu0 0.0
  %626 = vmatpush.msra.mxu0 0.0
  %627 = vmatpush.msra.mxu0 0.0
  %628 = vmatpush.msra.mxu0 0.0
  %629 = vmatpush.msra.mxu0 0.0
  %630 = vmatpush.msra.mxu0 0.0
  %631 = vmatpush.msra.mxu0 %v543
  %632 = vmatpush.msra.mxu0 %v542
  %633 = vmatpush.msra.mxu0 %v541
  %634 = vmatpush.msra.mxu0 %v540
  %635 = vmatmul.f32.gmra.mxu0 %v608
  %v636 = vpop.f32.mrf.mxu0
  %v637 = vadd.f32 %v596, %v636
  %638 = vmatmul.f32.gmra.mxu0 %v611
  %v639 = vpop.f32.mrf.mxu0
  %v640 = vadd.f32 %v599, %v639
  %641 = vmatmul.f32.gmra.mxu0 %v614
  %v642 = vpop.f32.mrf.mxu0
  %v643 = vadd.f32 %v602, %v642
  %644 = vmatmul.f32.gmra.mxu0 %v617
  %v645 = vpop.f32.mrf.mxu0
  %v646 = vadd.f32 %v605, %v645
  %647 = vdwg.mxu0
  %648 = vrot.lane.b32.xlu0 %v540, 8
  %v649 = vpop.permute.xlu0 %648
  %650 = vrot.lane.b32.xlu0 %v541, 8
  %v651 = vpop.permute.xlu0 %650
  %652 = vrot.lane.b32.xlu0 %v542, 8
  %v653 = vpop.permute.xlu0 %652
  %654 = vrot.lane.b32.xlu0 %v543, 8
  %v655 = vpop.permute.xlu0 %654
  %v656 = vmul.f32 %v649, %v130
  %v657 = vmul.f32 %v651, %v130
  %v658 = vmul.f32 %v653, %v130
  %v659 = vmul.f32 %v655, %v130
  %s660 = scalar_lea.vmem %s4, 32
  %v661 = vld [vmem:[%s660] sm:$0xff]
  %v662 = vld [vmem:[%s660 + $0x8] sm:$0xff]
  %v663 = vld [vmem:[%s660 + $0x10] sm:$0xff]
  %v664 = vld [vmem:[%s660 + $0x18] sm:$0xff]
  %v666 = vsel %vm565, %v661, 0
  %v669 = vsel %vm565, %v662, 0
  %v672 = vsel %vm565, %v663, 0
  %v675 = vsel %vm565, %v664, 0
  %677 = vmatpush.msra.mxu0 0.0
  %678 = vmatpush.msra.mxu0 0.0
  %679 = vmatpush.msra.mxu0 0.0
  %680 = vmatpush.msra.mxu0 0.0
  %681 = vmatpush.msra.mxu0 0.0
  %682 = vmatpush.msra.mxu0 0.0
  %683 = vmatpush.msra.mxu0 0.0
  %684 = vmatpush.msra.mxu0 0.0
  %685 = vmatpush.msra.mxu0 0.0
  %686 = vmatpush.msra.mxu0 0.0
  %687 = vmatpush.msra.mxu0 0.0
  %688 = vmatpush.msra.mxu0 0.0
  %689 = vmatpush.msra.mxu0 %v659
  %690 = vmatpush.msra.mxu0 %v658
  %691 = vmatpush.msra.mxu0 %v657
  %692 = vmatpush.msra.mxu0 %v656
  %693 = vmatmul.f32.gmra.mxu0 %v666
  %v694 = vpop.f32.mrf.mxu0
  %v695 = vadd.f32 0.0, %v694
  %696 = vmatmul.f32.gmra.mxu0 %v669
  %v697 = vpop.f32.mrf.mxu0
  %v698 = vadd.f32 0.0, %v697
  %699 = vmatmul.f32.gmra.mxu0 %v672
  %v700 = vpop.f32.mrf.mxu0
  %v701 = vadd.f32 0.0, %v700
  %702 = vmatmul.f32.gmra.mxu0 %v675
  %v703 = vpop.f32.mrf.mxu0
  %v704 = vadd.f32 0.0, %v703
  %705 = vdwg.mxu0
  %v706 = vadd.f32 %v637, %v695
  %v707 = vadd.f32 %v640, %v698
  %v708 = vadd.f32 %v643, %v701
  %v709 = vadd.f32 %v646, %v704
  %710 = vrot.lane.b32.xlu0 %v540, 7
  %v711 = vpop.permute.xlu0 %710
  %712 = vrot.lane.b32.xlu0 %v541, 7
  %v713 = vpop.permute.xlu0 %712
  %714 = vrot.lane.b32.xlu0 %v542, 7
  %v715 = vpop.permute.xlu0 %714
  %716 = vrot.lane.b32.xlu0 %v543, 7
  %v717 = vpop.permute.xlu0 %716
  %v718 = vmul.f32 %v711, %v185
  %v719 = vmul.f32 %v713, %v185
  %v720 = vmul.f32 %v715, %v185
  %v721 = vmul.f32 %v717, %v185
  %s722 = scalar_lea.vmem %s4, 64
  %v723 = vld [vmem:[%s722] sm:$0xff]
  %v724 = vld [vmem:[%s722 + $0x8] sm:$0xff]
  %v725 = vld [vmem:[%s722 + $0x10] sm:$0xff]
  %v726 = vld [vmem:[%s722 + $0x18] sm:$0xff]
  %v728 = vsel %vm565, %v723, 0
  %v731 = vsel %vm565, %v724, 0
  %v734 = vsel %vm565, %v725, 0
  %v737 = vsel %vm565, %v726, 0
  %739 = vmatpush.msra.mxu0 0.0
  %740 = vmatpush.msra.mxu0 0.0
  %741 = vmatpush.msra.mxu0 0.0
  %742 = vmatpush.msra.mxu0 0.0
  %743 = vmatpush.msra.mxu0 0.0
  %744 = vmatpush.msra.mxu0 0.0
  %745 = vmatpush.msra.mxu0 0.0
  %746 = vmatpush.msra.mxu0 0.0
  %747 = vmatpush.msra.mxu0 0.0
  %748 = vmatpush.msra.mxu0 0.0
  %749 = vmatpush.msra.mxu0 0.0
  %750 = vmatpush.msra.mxu0 0.0
  %751 = vmatpush.msra.mxu0 %v721
  %752 = vmatpush.msra.mxu0 %v720
  %753 = vmatpush.msra.mxu0 %v719
  %754 = vmatpush.msra.mxu0 %v718
  %755 = vmatmul.f32.gmra.mxu0 %v728
  %v756 = vpop.f32.mrf.mxu0
  %v757 = vadd.f32 0.0, %v756
  %758 = vmatmul.f32.gmra.mxu0 %v731
  %v759 = vpop.f32.mrf.mxu0
  %v760 = vadd.f32 0.0, %v759
  %761 = vmatmul.f32.gmra.mxu0 %v734
  %v762 = vpop.f32.mrf.mxu0
  %v763 = vadd.f32 0.0, %v762
  %764 = vmatmul.f32.gmra.mxu0 %v737
  %v765 = vpop.f32.mrf.mxu0
  %v766 = vadd.f32 0.0, %v765
  %767 = vdwg.mxu0
  %v768 = vadd.f32 %v706, %v757
  %v769 = vadd.f32 %v707, %v760
  %v770 = vadd.f32 %v708, %v763
  %v771 = vadd.f32 %v709, %v766
  %772 = vrot.lane.b32.xlu0 %v540, 1
  %v773 = vpop.permute.xlu0 %772
  %774 = vrot.lane.b32.xlu0 %v541, 1
  %v775 = vpop.permute.xlu0 %774
  %776 = vrot.lane.b32.xlu0 %v542, 1
  %v777 = vpop.permute.xlu0 %776
  %778 = vrot.lane.b32.xlu0 %v543, 1
  %v779 = vpop.permute.xlu0 %778
  %v780 = vmul.f32 %v773, %v240
  %v781 = vmul.f32 %v775, %v240
  %v782 = vmul.f32 %v777, %v240
  %v783 = vmul.f32 %v779, %v240
  %s784 = scalar_lea.vmem %s4, 96
  %v785 = vld [vmem:[%s784] sm:$0xff]
  %v786 = vld [vmem:[%s784 + $0x8] sm:$0xff]
  %v787 = vld [vmem:[%s784 + $0x10] sm:$0xff]
  %v788 = vld [vmem:[%s784 + $0x18] sm:$0xff]
  %v790 = vsel %vm565, %v785, 0
  %v793 = vsel %vm565, %v786, 0
  %v796 = vsel %vm565, %v787, 0
  %v799 = vsel %vm565, %v788, 0
  %801 = vmatpush.msra.mxu0 0.0
  %802 = vmatpush.msra.mxu0 0.0
  %803 = vmatpush.msra.mxu0 0.0
  %804 = vmatpush.msra.mxu0 0.0
  %805 = vmatpush.msra.mxu0 0.0
  %806 = vmatpush.msra.mxu0 0.0
  %807 = vmatpush.msra.mxu0 0.0
  %808 = vmatpush.msra.mxu0 0.0
  %809 = vmatpush.msra.mxu0 0.0
  %810 = vmatpush.msra.mxu0 0.0
  %811 = vmatpush.msra.mxu0 0.0
  %812 = vmatpush.msra.mxu0 0.0
  %813 = vmatpush.msra.mxu0 %v783
  %814 = vmatpush.msra.mxu0 %v782
  %815 = vmatpush.msra.mxu0 %v781
  %816 = vmatpush.msra.mxu0 %v780
  %817 = vmatmul.f32.gmra.mxu0 %v790
  %v818 = vpop.f32.mrf.mxu0
  %v819 = vadd.f32 0.0, %v818
  %820 = vmatmul.f32.gmra.mxu0 %v793
  %v821 = vpop.f32.mrf.mxu0
  %v822 = vadd.f32 0.0, %v821
  %823 = vmatmul.f32.gmra.mxu0 %v796
  %v824 = vpop.f32.mrf.mxu0
  %v825 = vadd.f32 0.0, %v824
  %826 = vmatmul.f32.gmra.mxu0 %v799
  %v827 = vpop.f32.mrf.mxu0
  %v828 = vadd.f32 0.0, %v827
  %829 = vdwg.mxu0
  %v830 = vadd.f32 %v768, %v819
  %v831 = vadd.f32 %v769, %v822
  %v832 = vadd.f32 %v770, %v825
  %v833 = vadd.f32 %v771, %v828
  %834 = vrot.lane.b32.xlu0 %v540, 127
  %v835 = vpop.permute.xlu0 %834
  %836 = vrot.lane.b32.xlu0 %v541, 127
  %v837 = vpop.permute.xlu0 %836
  %838 = vrot.lane.b32.xlu0 %v542, 127
  %v839 = vpop.permute.xlu0 %838
  %840 = vrot.lane.b32.xlu0 %v543, 127
  %v841 = vpop.permute.xlu0 %840
  %v842 = vmul.f32 %v835, %v295
  %v843 = vmul.f32 %v837, %v295
  %v844 = vmul.f32 %v839, %v295
  %v845 = vmul.f32 %v841, %v295
  %s846 = scalar_lea.vmem %s4, 160
  %v847 = vld [vmem:[%s846] sm:$0xff]
  %v848 = vld [vmem:[%s846 + $0x8] sm:$0xff]
  %v849 = vld [vmem:[%s846 + $0x10] sm:$0xff]
  %v850 = vld [vmem:[%s846 + $0x18] sm:$0xff]
  %v852 = vsel %vm565, %v847, 0
  %v855 = vsel %vm565, %v848, 0
  %v858 = vsel %vm565, %v849, 0
  %v861 = vsel %vm565, %v850, 0
  %863 = vmatpush.msra.mxu0 0.0
  %864 = vmatpush.msra.mxu0 0.0
  %865 = vmatpush.msra.mxu0 0.0
  %866 = vmatpush.msra.mxu0 0.0
  %867 = vmatpush.msra.mxu0 0.0
  %868 = vmatpush.msra.mxu0 0.0
  %869 = vmatpush.msra.mxu0 0.0
  %870 = vmatpush.msra.mxu0 0.0
  %871 = vmatpush.msra.mxu0 0.0
  %872 = vmatpush.msra.mxu0 0.0
  %873 = vmatpush.msra.mxu0 0.0
  %874 = vmatpush.msra.mxu0 0.0
  %875 = vmatpush.msra.mxu0 %v845
  %876 = vmatpush.msra.mxu0 %v844
  %877 = vmatpush.msra.mxu0 %v843
  %878 = vmatpush.msra.mxu0 %v842
  %879 = vmatmul.f32.gmra.mxu0 %v852
  %v880 = vpop.f32.mrf.mxu0
  %v881 = vadd.f32 0.0, %v880
  %882 = vmatmul.f32.gmra.mxu0 %v855
  %v883 = vpop.f32.mrf.mxu0
  %v884 = vadd.f32 0.0, %v883
  %885 = vmatmul.f32.gmra.mxu0 %v858
  %v886 = vpop.f32.mrf.mxu0
  %v887 = vadd.f32 0.0, %v886
  %888 = vmatmul.f32.gmra.mxu0 %v861
  %v889 = vpop.f32.mrf.mxu0
  %v890 = vadd.f32 0.0, %v889
  %891 = vdwg.mxu0
  %v892 = vadd.f32 %v830, %v881
  %v893 = vadd.f32 %v831, %v884
  %v894 = vadd.f32 %v832, %v887
  %v895 = vadd.f32 %v833, %v890
  %896 = vrot.lane.b32.xlu0 %v540, 121
  %v897 = vpop.permute.xlu0 %896
  %898 = vrot.lane.b32.xlu0 %v541, 121
  %v899 = vpop.permute.xlu0 %898
  %900 = vrot.lane.b32.xlu0 %v542, 121
  %v901 = vpop.permute.xlu0 %900
  %902 = vrot.lane.b32.xlu0 %v543, 121
  %v903 = vpop.permute.xlu0 %902
  %v904 = vmul.f32 %v897, %v350
  %v905 = vmul.f32 %v899, %v350
  %v906 = vmul.f32 %v901, %v350
  %v907 = vmul.f32 %v903, %v350
  %s908 = scalar_lea.vmem %s4, 192
  %v909 = vld [vmem:[%s908] sm:$0xff]
  %v910 = vld [vmem:[%s908 + $0x8] sm:$0xff]
  %v911 = vld [vmem:[%s908 + $0x10] sm:$0xff]
  %v912 = vld [vmem:[%s908 + $0x18] sm:$0xff]
  %v914 = vsel %vm565, %v909, 0
  %v917 = vsel %vm565, %v910, 0
  %v920 = vsel %vm565, %v911, 0
  %v923 = vsel %vm565, %v912, 0
  %925 = vmatpush.msra.mxu0 0.0
  %926 = vmatpush.msra.mxu0 0.0
  %927 = vmatpush.msra.mxu0 0.0
  %928 = vmatpush.msra.mxu0 0.0
  %929 = vmatpush.msra.mxu0 0.0
  %930 = vmatpush.msra.mxu0 0.0
  %931 = vmatpush.msra.mxu0 0.0
  %932 = vmatpush.msra.mxu0 0.0
  %933 = vmatpush.msra.mxu0 0.0
  %934 = vmatpush.msra.mxu0 0.0
  %935 = vmatpush.msra.mxu0 0.0
  %936 = vmatpush.msra.mxu0 0.0
  %937 = vmatpush.msra.mxu0 %v907
  %938 = vmatpush.msra.mxu0 %v906
  %939 = vmatpush.msra.mxu0 %v905
  %940 = vmatpush.msra.mxu0 %v904
  %941 = vmatmul.f32.gmra.mxu0 %v914
  %v942 = vpop.f32.mrf.mxu0
  %v943 = vadd.f32 0.0, %v942
  %944 = vmatmul.f32.gmra.mxu0 %v917
  %v945 = vpop.f32.mrf.mxu0
  %v946 = vadd.f32 0.0, %v945
  %947 = vmatmul.f32.gmra.mxu0 %v920
  %v948 = vpop.f32.mrf.mxu0
  %v949 = vadd.f32 0.0, %v948
  %950 = vmatmul.f32.gmra.mxu0 %v923
  %v951 = vpop.f32.mrf.mxu0
  %v952 = vadd.f32 0.0, %v951
  %953 = vdwg.mxu0
  %v954 = vadd.f32 %v892, %v943
  %v955 = vadd.f32 %v893, %v946
  %v956 = vadd.f32 %v894, %v949
  %v957 = vadd.f32 %v895, %v952
  %958 = vrot.lane.b32.xlu0 %v540, 120
  %v959 = vpop.permute.xlu0 %958
  %960 = vrot.lane.b32.xlu0 %v541, 120
  %v961 = vpop.permute.xlu0 %960
  %962 = vrot.lane.b32.xlu0 %v542, 120
  %v963 = vpop.permute.xlu0 %962
  %964 = vrot.lane.b32.xlu0 %v543, 120
  %v965 = vpop.permute.xlu0 %964
  %v966 = vmul.f32 %v959, %v405
  %v967 = vmul.f32 %v961, %v405
  %v968 = vmul.f32 %v963, %v405
  %v969 = vmul.f32 %v965, %v405
  %s970 = scalar_lea.vmem %s4, 224
  %v971 = vld [vmem:[%s970] sm:$0xff]
  %v972 = vld [vmem:[%s970 + $0x8] sm:$0xff]
  %v973 = vld [vmem:[%s970 + $0x10] sm:$0xff]
  %v974 = vld [vmem:[%s970 + $0x18] sm:$0xff]
  %v976 = vsel %vm565, %v971, 0
  %v979 = vsel %vm565, %v972, 0
  %v982 = vsel %vm565, %v973, 0
  %v985 = vsel %vm565, %v974, 0
  %987 = vmatpush.msra.mxu0 0.0
  %988 = vmatpush.msra.mxu0 0.0
  %989 = vmatpush.msra.mxu0 0.0
  %990 = vmatpush.msra.mxu0 0.0
  %991 = vmatpush.msra.mxu0 0.0
  %992 = vmatpush.msra.mxu0 0.0
  %993 = vmatpush.msra.mxu0 0.0
  %994 = vmatpush.msra.mxu0 0.0
  %995 = vmatpush.msra.mxu0 0.0
  %996 = vmatpush.msra.mxu0 0.0
  %997 = vmatpush.msra.mxu0 0.0
  %998 = vmatpush.msra.mxu0 0.0
  %999 = vmatpush.msra.mxu0 %v969
  %1000 = vmatpush.msra.mxu0 %v968
  %1001 = vmatpush.msra.mxu0 %v967
  %1002 = vmatpush.msra.mxu0 %v966
  %1003 = vmatmul.f32.gmra.mxu0 %v976
  %v1004 = vpop.f32.mrf.mxu0
  %v1005 = vadd.f32 0.0, %v1004
  %1006 = vmatmul.f32.gmra.mxu0 %v979
  %v1007 = vpop.f32.mrf.mxu0
  %v1008 = vadd.f32 0.0, %v1007
  %1009 = vmatmul.f32.gmra.mxu0 %v982
  %v1010 = vpop.f32.mrf.mxu0
  %v1011 = vadd.f32 0.0, %v1010
  %1012 = vmatmul.f32.gmra.mxu0 %v985
  %v1013 = vpop.f32.mrf.mxu0
  %v1014 = vadd.f32 0.0, %v1013
  %1015 = vdwg.mxu0
  %v1016 = vadd.f32 %v954, %v1005
  %v1017 = vadd.f32 %v955, %v1008
  %v1018 = vadd.f32 %v956, %v1011
  %v1019 = vadd.f32 %v957, %v1014
  %1020 = vrot.lane.b32.xlu0 %v540, 119
  %v1021 = vpop.permute.xlu0 %1020
  %1022 = vrot.lane.b32.xlu0 %v541, 119
  %v1023 = vpop.permute.xlu0 %1022
  %1024 = vrot.lane.b32.xlu0 %v542, 119
  %v1025 = vpop.permute.xlu0 %1024
  %1026 = vrot.lane.b32.xlu0 %v543, 119
  %v1027 = vpop.permute.xlu0 %1026
  %v1028 = vmul.f32 %v1021, %v460
  %v1029 = vmul.f32 %v1023, %v460
  %v1030 = vmul.f32 %v1025, %v460
  %v1031 = vmul.f32 %v1027, %v460
  %s1032 = scalar_lea.vmem %s4, 256
  %v1033 = vld [vmem:[%s1032] sm:$0xff]
  %v1034 = vld [vmem:[%s1032 + $0x8] sm:$0xff]
  %v1035 = vld [vmem:[%s1032 + $0x10] sm:$0xff]
  %v1036 = vld [vmem:[%s1032 + $0x18] sm:$0xff]
  %v1038 = vsel %vm565, %v1033, 0
  %v1041 = vsel %vm565, %v1034, 0
  %v1044 = vsel %vm565, %v1035, 0
  %v1047 = vsel %vm565, %v1036, 0
  %1049 = vmatpush.msra.mxu0 0.0
  %1050 = vmatpush.msra.mxu0 0.0
  %1051 = vmatpush.msra.mxu0 0.0
  %1052 = vmatpush.msra.mxu0 0.0
  %1053 = vmatpush.msra.mxu0 0.0
  %1054 = vmatpush.msra.mxu0 0.0
  %1055 = vmatpush.msra.mxu0 0.0
  %1056 = vmatpush.msra.mxu0 0.0
  %1057 = vmatpush.msra.mxu0 0.0
  %1058 = vmatpush.msra.mxu0 0.0
  %1059 = vmatpush.msra.mxu0 0.0
  %1060 = vmatpush.msra.mxu0 0.0
  %1061 = vmatpush.msra.mxu0 %v1031
  %1062 = vmatpush.msra.mxu0 %v1030
  %1063 = vmatpush.msra.mxu0 %v1029
  %1064 = vmatpush.msra.mxu0 %v1028
  %1065 = vmatmul.f32.gmra.mxu0 %v1038
  %v1066 = vpop.f32.mrf.mxu0
  %v1067 = vadd.f32 0.0, %v1066
  %1068 = vmatmul.f32.gmra.mxu0 %v1041
  %v1069 = vpop.f32.mrf.mxu0
  %v1070 = vadd.f32 0.0, %v1069
  %1071 = vmatmul.f32.gmra.mxu0 %v1044
  %v1072 = vpop.f32.mrf.mxu0
  %v1073 = vadd.f32 0.0, %v1072
  %1074 = vmatmul.f32.gmra.mxu0 %v1047
  %v1075 = vpop.f32.mrf.mxu0
  %v1076 = vadd.f32 0.0, %v1075
  %1077 = vdwg.mxu0
  %v1078 = vadd.f32 %v1016, %v1067
  %v1079 = vadd.f32 %v1017, %v1070
  %v1080 = vadd.f32 %v1018, %v1073
  %v1081 = vadd.f32 %v1019, %v1076
  %v1082 = vld [vmem:[%s5] sm:$0xff]
  %v1083 = vld [vmem:[%s5 + $0x8] sm:$0xff]
  %v1084 = vld [vmem:[%s5 + $0x10] sm:$0xff]
  %v1085 = vld [vmem:[%s5 + $0x18] sm:$0xff]
  %1087 = vset.pattern.permute.xlu0 0
  %1088 = vperm.xlu0 %1087, %v1082
  %v1089 = vpop.permute.xlu0 %1088
  %1092 = vset.pattern.permute.xlu0 0
  %1093 = vperm.xlu0 %1092, %v1083
  %v1094 = vpop.permute.xlu0 %1093
  %1097 = vset.pattern.permute.xlu0 0
  %1098 = vperm.xlu0 %1097, %v1084
  %v1099 = vpop.permute.xlu0 %1098
  %1102 = vset.pattern.permute.xlu0 0
  %1103 = vperm.xlu0 %1102, %v1085
  %v1104 = vpop.permute.xlu0 %1103
  %v1106 = vadd.f32 %v1078, %v1089
  %v1107 = vadd.f32 %v1079, %v1094
  %v1108 = vadd.f32 %v1080, %v1099
  %v1109 = vadd.f32 %v1081, %v1104
  %v1110 = vmax.f32 %v1106, 0.0
  %v1111 = vmax.f32 %v1107, 0.0
  %v1112 = vmax.f32 %v1108, 0.0
  %v1113 = vmax.f32 %v1109, 0.0
  %v1114 = vld [vmem:[%s6] sm:$0x7]
  %v1115 = vld [vmem:[%s7] sm:$0x7]
  %v1117 = vsel %vm565, %v1114, 0
  %1119 = vmatpush.msra.mxu0 0.0
  %1120 = vmatpush.msra.mxu0 0.0
  %1121 = vmatpush.msra.mxu0 0.0
  %1122 = vmatpush.msra.mxu0 0.0
  %1123 = vmatpush.msra.mxu0 0.0
  %1124 = vmatpush.msra.mxu0 0.0
  %1125 = vmatpush.msra.mxu0 0.0
  %1126 = vmatpush.msra.mxu0 0.0
  %1127 = vmatpush.msra.mxu0 0.0
  %1128 = vmatpush.msra.mxu0 0.0
  %1129 = vmatpush.msra.mxu0 0.0
  %1130 = vmatpush.msra.mxu0 0.0
  %1131 = vmatpush.msra.mxu0 %v1113
  %1132 = vmatpush.msra.mxu0 %v1112
  %1133 = vmatpush.msra.mxu0 %v1111
  %1134 = vmatpush.msra.mxu0 %v1110
  %1135 = vmatmul.f32.gmra.mxu0 %v1117
  %v1136 = vpop.f32.mrf.mxu0
  %v1137 = vadd.f32 %v1115, %v1136
  %1138 = vdwg.mxu0
  %1139 = vst [vmem:[%s8] sm:$0x7] %v1137
  // Predicated region
  $region34: #{embedding_forward_pallas.1} parent=0 // pred_check
    _
  $region35: #{embedding_forward_pallas.1} parent=0 // pred_check_branch
    %1141 = sbr.rel (0) target = $region37
  $region36: #{embedding_forward_pallas.1} parent=0 // pred_region
    _
  $region37: #{embedding_forward_pallas.1} parent=0 // pred_fallthru
    _
  // Predicated region
  $region38: #{embedding_forward_pallas.1} parent=0 // pred_check
    _
  $region39: #{embedding_forward_pallas.1} parent=0 // pred_check_branch
    %1143 = sbr.rel (0) target = $region41
  $region40: #{embedding_forward_pallas.1} parent=0 // pred_region
    _
  $region41: #{embedding_forward_pallas.1} parent=0 // pred_fallthru
    _

</llo_original>
